<compile_context>
chip_gen: v6e
topology: v6e:2x2x1
jax: 0.10.0
libtpu: 0.0.40
codegen_flags: <defaults>
</compile_context>

<pallas_src>
import functools
import math

import jax
import jax.numpy as jnp
from jax.experimental import pallas as pl
from jax.experimental.pallas import tpu as pltpu


def _round_up(x, m):
    return ((x + m - 1) // m) * m


# ----------------------------------------------------------------------------
# Pallas kernel: one batch *tile* (TB samples) per grid step.
# ----------------------------------------------------------------------------
def _model_ib_kernel(
    x_ref,        # [TB, Np, F]   stacked (zero-padded) node features
    lab_ref,      # [TB, R]       retrieved_label_list rows
    wn_ref, bn_ref,             # node projection   [F, D], [1, D]
    wq_ref,                     # anchor query      [D, D]
    wkv_ref,                    # fused K|V         [D, 2D]
    w1_ref, b1_ref,             # predict_linear_1  [D, D], [1, D]
    wl_ref, bl_ref,             # label_embedding   [R, D], [1, D]
    w2a_ref, w2b_ref, b2_ref,   # predict_linear_2 split: [1, D], [1, D], [1, 1]
    o_ref,        # [1, 1, TB]   lane-dense per-tile output
    *, n_valid,
):
    f32 = jnp.float32
    TB, Np, F = x_ref.shape
    D = wq_ref.shape[0]

    # --- GraphLearner_IB: node projection, all TB*Np nodes in one MXU matmul
    x2 = x_ref[...].reshape(TB * Np, F)
    h2 = jnp.tanh(jnp.dot(x2, wn_ref[...], preferred_element_type=f32)
                  + bn_ref[...])                                      # [TB*Np, D]

    # fused K|V projection (single 2D-wide MXU push instead of two D-wide ones)
    kv2 = jnp.dot(h2, wkv_ref[...], preferred_element_type=f32)       # [TB*Np, 2D]

    h3 = h2.reshape(TB, Np, D)
    kv3 = kv2.reshape(TB, Np, 2 * D)
    k = kv3[:, :, :D]                                                 # [TB, Np, D]
    v = kv3[:, :, D:]                                                 # [TB, Np, D]

    # --- anchor-only attention: only node 0's softmax row is consumed, so we
    #     compute just that row (q has a singleton "query" axis).
    q0 = jnp.dot(h3[:, 0, :], wq_ref[...], preferred_element_type=f32)  # [TB, D]
    q0 = q0.reshape(TB, 1, D)

    s = jnp.einsum("bqd,bkd->bqk", q0, k,
                   preferred_element_type=f32) * (1.0 / math.sqrt(D))   # [TB, 1, Np]

    if n_valid < Np:   # mask zero-padded node columns
        col = jax.lax.broadcasted_iota(jnp.int32, (TB, 1, Np), 2)
        s = jnp.where(col < n_valid, s, -1e30)

    s = s - jnp.max(s, axis=-1, keepdims=True)
    p = jnp.exp(s)
    p = p / jnp.sum(p, axis=-1, keepdims=True)                        # [TB, 1, Np]

    hp = jnp.einsum("bqk,bkd->bqd", p, v, preferred_element_type=f32)  # [TB, 1, D]
    hetero = jnp.maximum(hp[:, 0, :], 0.0)                            # [TB, D]

    # --- prediction head --------------------------------------------------
    out1 = jnp.dot(hetero, w1_ref[...], preferred_element_type=f32) + b1_ref[...]
    label_emb = (jnp.dot(lab_ref[...], wl_ref[...], preferred_element_type=f32)
                 + bl_ref[...])                                       # [TB, D]

    # concat + Linear(2D, 1) realised as a VPU multiply-reduce: no lane-axis
    # concatenate, no width-1 MXU matmul.
    y = (jnp.sum(out1 * w2a_ref[...] + label_emb * w2b_ref[...],
                 axis=-1, keepdims=True)
         + b2_ref[...])                                               # [TB, 1]
    o_ref[...] = y.reshape(1, 1, TB)


# ----------------------------------------------------------------------------
# Wrapper
# ----------------------------------------------------------------------------
def model_ib_forward(retrieved_label_list, x_nodes, params, *, batch_tile=8):
    """retrieved_label_list: [B, R] float32, x_nodes: [B, N, F] float32."""
    B, N, F = x_nodes.shape
    R = retrieved_label_list.shape[1]
    D = params["w_node"].shape[1]

    # pad node count to a sublane multiple and the batch to a full tile.
    Np = _round_up(N, 8)
    TB = max(8, _round_up(min(batch_tile, B), 8))
    Bp = _round_up(B, TB)
    num_tiles = Bp // TB
    # NOTE(v7x): for large batches keep num_tiles >= 2 so both TensorCores get
    # work; for v5e/v6e a single big tile is fine.  VMEM footprint here is KiB.

    x_p = jnp.zeros((Bp, Np, F), jnp.float32).at[:B, :N, :].set(
        x_nodes.astype(jnp.float32))
    lab_p = jnp.zeros((Bp, R), jnp.float32).at[:B, :].set(
        retrieved_label_list.astype(jnp.float32))

    # fused K|V weight; split w2 so the final Linear(2D, 1) is a VPU reduce.
    wkv = jnp.concatenate([params["w_k"], params["w_v"]], axis=1)       # [D, 2D]
    w2a = params["w2"][:D, :].T                                         # [1, D]
    w2b = params["w2"][D:, :].T                                         # [1, D]

    weight_args = (
        params["w_node"], params["b_node"],
        params["w_q"], wkv,
        params["w1"], params["b1"],
        params["w_label"], params["b_label"],
        w2a, w2b, params["b2"],
    )

    # weights: full-array blocks with constant index maps -> stay VMEM-resident
    # across grid steps (Pallas skips re-DMA when the block index is unchanged).
    def _full_spec(a):
        nd = a.ndim
        return pl.BlockSpec(a.shape, lambda b, _nd=nd: (0,) * _nd)

    in_specs = [
        pl.BlockSpec((TB, Np, F), lambda b: (b, 0, 0)),   # node features
        pl.BlockSpec((TB, R), lambda b: (b, 0)),          # labels
    ] + [_full_spec(w) for w in weight_args]

    kernel = functools.partial(_model_ib_kernel, n_valid=N)

    out = pl.pallas_call(
        kernel,
        out_shape=jax.ShapeDtypeStruct((num_tiles, 1, TB), jnp.float32),
        grid_spec=pltpu.PrefetchScalarGridSpec(
            num_scalar_prefetch=0,
            grid=(num_tiles,),
            in_specs=in_specs,
            out_specs=pl.BlockSpec((1, 1, TB), lambda b: (b, 0, 0)),
        ),
        compiler_params=pltpu.CompilerParams(
            dimension_semantics=("parallel",),
        ),
    )(x_p, lab_p, *weight_args)

    return out.reshape(Bp)[:B].reshape(B, 1)


# ----------------------------------------------------------------------------
# Pure-JAX reference (full attention; row 0 == anchor-only row) for checking
# ----------------------------------------------------------------------------
def model_ib_reference(retrieved_label_list, x_nodes, params):
    h = jnp.tanh(x_nodes @ params["w_node"] + params["b_node"])      # [B, N, D]
    q = h @ params["w_q"]
    k = h @ params["w_k"]
    v = h @ params["w_v"]
    d = q.shape[-1]
    s = jnp.einsum("bnd,bmd->bnm", q, k) / math.sqrt(d)
    p = jax.nn.softmax(s, axis=-1)
    hp = jnp.maximum(jnp.einsum("bnm,bmd->bnd", p, v), 0.0)
    hetero = hp[:, 0, :]                                             # [B, D]
    out1 = hetero @ params["w1"] + params["b1"]
    label_emb = retrieved_label_list @ params["w_label"] + params["b_label"]
    cat = jnp.concatenate([out1, label_emb], axis=1)
    return cat @ params["w2"] + params["b2"]                         # [B, 1]


# ----------------------------------------------------------------------------
# Deterministic parameter init + driver
# ----------------------------------------------------------------------------
def init_params(key, retrieval_num, feature_dim, hidden_dim):
    F, D, R = feature_dim, hidden_dim, retrieval_num
    ks = jax.random.split(key, 12)

    def w(k, shape):
        return jax.random.normal(k, shape, jnp.float32) * (1.0 / math.sqrt(shape[0]))

    return {
        # GraphLearner_IB
        "w_node": w(ks[0], (F, D)), "b_node": jnp.zeros((1, D), jnp.float32),
        "w_q": w(ks[1], (D, D)),
        "w_k": w(ks[2], (D, D)),
        "w_v": w(ks[3], (D, D)),
        # predict_linear_1: Linear(D, D)
        "w1": w(ks[4], (D, D)), "b1": 0.01 * jnp.ones((1, D), jnp.float32),
        # label_embedding_linear: Linear(R, D)
        "w_label": w(ks[5], (R, D)), "b_label": 0.01 * jnp.ones((1, D), jnp.float32),
        # predict_linear_2: Linear(2D, 1)
        "w2": w(ks[6], (2 * D, 1)), "b2": 0.01 * jnp.ones((1, 1), jnp.float32),
    }


if __name__ == "__main__":
    B, R, F, D = 2, 8, 16, 32          # batch, retrieval_num, feature_dim, hidden_dim
    key = jax.random.PRNGKey(0)
    k = jax.random.split(key, 8)

    retrieved_label_list = jax.random.uniform(k[0], (B, R), jnp.float32)
    mean_pooling_vec = jax.random.normal(k[1], (B, F), jnp.float32)
    merge_text_vec = jax.random.normal(k[2], (B, F), jnp.float32)
    compress_vec = jax.random.normal(k[3], (B, F), jnp.float32)
    retrieved_visual_feature_embedding_cls = jax.random.normal(k[4], (B, R, F), jnp.float32)
    retrieved_textual_feature_embedding = jax.random.normal(k[5], (B, R, F), jnp.float32)

    params = init_params(k[6], R, F, D)

    # Stack heterogeneous nodes: [anchor_text, anchor_pool, anchor_compress,
    #                             retrieved_textual..., retrieved_visual...]
    x_nodes = jnp.concatenate(
        [
            merge_text_vec[:, None, :],
            mean_pooling_vec[:, None, :],
            compress_vec[:, None, :],
            retrieved_textual_feature_embedding,
            retrieved_visual_feature_embedding_cls,
        ],
        axis=1,
    )  # [B, 3 + 2R, F]

    out = model_ib_forward(retrieved_label_list, x_nodes, params)
    out = jax.block_until_ready(out)

    ref = model_ib_reference(retrieved_label_list, x_nodes, params)
    assert out.shape == (B, 1), out.shape
    assert jnp.allclose(out, ref, atol=1e-4, rtol=1e-4), (out, ref)

    print("KERNEL_OK")
</pallas_src>

<mosaic_0001>
module attributes {stable_mosaic.version = 11 : i64} {
  func.func @_model_ib_kernel(%arg0: i32, %arg1: memref<8x24x16xf32, #tpu.memory_space<vmem>>, %arg2: memref<8x8xf32, #tpu.memory_space<vmem>>, %arg3: memref<16x32xf32, #tpu.memory_space<vmem>>, %arg4: memref<1x32xf32, #tpu.memory_space<vmem>>, %arg5: memref<32x32xf32, #tpu.memory_space<vmem>>, %arg6: memref<32x64xf32, #tpu.memory_space<vmem>>, %arg7: memref<32x32xf32, #tpu.memory_space<vmem>>, %arg8: memref<1x32xf32, #tpu.memory_space<vmem>>, %arg9: memref<8x32xf32, #tpu.memory_space<vmem>>, %arg10: memref<1x32xf32, #tpu.memory_space<vmem>>, %arg11: memref<1x32xf32, #tpu.memory_space<vmem>>, %arg12: memref<1x32xf32, #tpu.memory_space<vmem>>, %arg13: memref<1x1xf32, #tpu.memory_space<vmem>>, %arg14: memref<1x1x8xf32, #tpu.memory_space<vmem>>) attributes {dimension_semantics = [#tpu.dimension_semantics<parallel>], iteration_bounds = array<i64: 1>, scalar_prefetch = 0 : i64, scratch_operands = 0 : i64, tpu.core_type = #tpu.core_type<tc>, window_params = [{transform_indices = @transform_0, window_bounds = array<i64: 8, 24, 16>}, {transform_indices = @transform_1, window_bounds = array<i64: 8, 8>}, {pipeline_mode = #tpu.pipeline_mode<synchronous>, transform_indices = @transform_2, window_bounds = array<i64: 16, 32>}, {pipeline_mode = #tpu.pipeline_mode<synchronous>, transform_indices = @transform_3, window_bounds = array<i64: 1, 32>}, {pipeline_mode = #tpu.pipeline_mode<synchronous>, transform_indices = @transform_4, window_bounds = array<i64: 32, 32>}, {pipeline_mode = #tpu.pipeline_mode<synchronous>, transform_indices = @transform_5, window_bounds = array<i64: 32, 64>}, {pipeline_mode = #tpu.pipeline_mode<synchronous>, transform_indices = @transform_6, window_bounds = array<i64: 32, 32>}, {pipeline_mode = #tpu.pipeline_mode<synchronous>, transform_indices = @transform_7, window_bounds = array<i64: 1, 32>}, {pipeline_mode = #tpu.pipeline_mode<synchronous>, transform_indices = @transform_8, window_bounds = array<i64: 8, 32>}, {pipeline_mode = #tpu.pipeline_mode<synchronous>, transform_indices = @transform_9, window_bounds = array<i64: 1, 32>}, {pipeline_mode = #tpu.pipeline_mode<synchronous>, transform_indices = @transform_10, window_bounds = array<i64: 1, 32>}, {pipeline_mode = #tpu.pipeline_mode<synchronous>, transform_indices = @transform_11, window_bounds = array<i64: 1, 32>}, {pipeline_mode = #tpu.pipeline_mode<synchronous>, transform_indices = @transform_12, window_bounds = array<i64: 1, 1>}, {transform_indices = @transform_13, window_bounds = array<i64: 1, 1, 8>}]} {
    %c0 = arith.constant 0 : index
    %c0_0 = arith.constant 0 : index
    %c0_1 = arith.constant 0 : index
    %0 = vector.load %arg1[%c0, %c0_0, %c0_1] : memref<8x24x16xf32, #tpu.memory_space<vmem>>, vector<8x24x16xf32>
    %1 = vector.shape_cast %0 : vector<8x24x16xf32> to vector<192x16xf32>
    %c0_2 = arith.constant 0 : index
    %c0_3 = arith.constant 0 : index
    %2 = vector.load %arg3[%c0_2, %c0_3] : memref<16x32xf32, #tpu.memory_space<vmem>>, vector<16x32xf32>
    %cst = arith.constant dense<0.000000e+00> : vector<192x32xf32>
    %3 = tpu.matmul %1, %2, %cst {dimension_numbers = #tpu.dot_dimension_numbers<[1], [0], [0], [1], [0, 0, 1, 1], [], []>} : vector<192x16xf32>, vector<16x32xf32>, vector<192x32xf32> -> vector<192x32xf32>
    %c0_4 = arith.constant 0 : index
    %c0_5 = arith.constant 0 : index
    %4 = vector.load %arg4[%c0_4, %c0_5] : memref<1x32xf32, #tpu.memory_space<vmem>>, vector<1x32xf32>
    %5 = vector.broadcast %4 : vector<1x32xf32> to vector<192x32xf32>
    %6 = arith.addf %3, %5 : vector<192x32xf32>
    %7 = math.tanh %6 : vector<192x32xf32>
    %c0_6 = arith.constant 0 : index
    %c0_7 = arith.constant 0 : index
    %8 = vector.load %arg6[%c0_6, %c0_7] : memref<32x64xf32, #tpu.memory_space<vmem>>, vector<32x64xf32>
    %cst_8 = arith.constant dense<0.000000e+00> : vector<192x64xf32>
    %9 = tpu.matmul %7, %8, %cst_8 {dimension_numbers = #tpu.dot_dimension_numbers<[1], [0], [0], [1], [0, 0, 1, 1], [], []>} : vector<192x32xf32>, vector<32x64xf32>, vector<192x64xf32> -> vector<192x64xf32>
    %10 = vector.shape_cast %7 : vector<192x32xf32> to vector<8x24x32xf32>
    %11 = vector.shape_cast %9 : vector<192x64xf32> to vector<8x24x64xf32>
    %12 = vector.extract_strided_slice %11 {offsets = [0, 0, 0], sizes = [8, 24, 32], strides = [1, 1, 1]} : vector<8x24x64xf32> to vector<8x24x32xf32>
    %13 = vector.extract_strided_slice %11 {offsets = [0, 0, 32], sizes = [8, 24, 32], strides = [1, 1, 1]} : vector<8x24x64xf32> to vector<8x24x32xf32>
    %14 = vector.extract_strided_slice %10 {offsets = [0, 0, 0], sizes = [8, 1, 32], strides = [1, 1, 1]} : vector<8x24x32xf32> to vector<8x1x32xf32>
    %15 = vector.shape_cast %14 : vector<8x1x32xf32> to vector<8x32xf32>
    %c0_9 = arith.constant 0 : index
    %c0_10 = arith.constant 0 : index
    %16 = vector.load %arg5[%c0_9, %c0_10] : memref<32x32xf32, #tpu.memory_space<vmem>>, vector<32x32xf32>
    %cst_11 = arith.constant dense<0.000000e+00> : vector<8x32xf32>
    %17 = tpu.matmul %15, %16, %cst_11 {dimension_numbers = #tpu.dot_dimension_numbers<[1], [0], [0], [1], [0, 0, 1, 1], [], []>} : vector<8x32xf32>, vector<32x32xf32>, vector<8x32xf32> -> vector<8x32xf32>
    %18 = vector.shape_cast %17 : vector<8x32xf32> to vector<8x1x32xf32>
    "tpu.trace_start"() <{level = 10 : i32, message = "bqd,bkd->bqk"}> : () -> ()
    %cst_12 = arith.constant dense<0.000000e+00> : vector<8x1x24xf32>
    %19 = tpu.matmul %18, %12, %cst_12 {dimension_numbers = #tpu.dot_dimension_numbers<[2], [2], [1], [1], [0, 0, 0, 1, 1, 1], [0], [0]>} : vector<8x1x32xf32>, vector<8x24x32xf32>, vector<8x1x24xf32> -> vector<8x1x24xf32>
    "tpu.trace_stop"() : () -> ()
    %cst_13 = arith.constant 0.176776692 : f32
    %20 = vector.broadcast %cst_13 : f32 to vector<8x1x24xf32>
    %21 = arith.mulf %19, %20 : vector<8x1x24xf32>
    %22 = tpu.iota {dimensions = array<i32: 2>} : vector<8x1x24xi32>
    %c19_i32 = arith.constant 19 : i32
    %23 = vector.broadcast %c19_i32 : i32 to vector<8x1x24xi32>
    %24 = arith.cmpi slt, %22, %23 : vector<8x1x24xi32>
    %cst_14 = arith.constant -1.000000e+30 : f32
    %25 = vector.broadcast %cst_14 : f32 to vector<8x1x24xf32>
    %26 = arith.select %24, %21, %25 : vector<8x1x24xi1>, vector<8x1x24xf32>
    %cst_15 = arith.constant dense<0xFF800000> : vector<8x1xf32>
    %27 = vector.multi_reduction <maximumf>, %26, %cst_15 [2] : vector<8x1x24xf32> to vector<8x1xf32>
    %28 = vector.shape_cast %27 : vector<8x1xf32> to vector<8x1x1xf32>
    %29 = vector.broadcast %28 : vector<8x1x1xf32> to vector<8x1x24xf32>
    %30 = arith.subf %26, %29 : vector<8x1x24xf32>
    %31 = math.exp %30 : vector<8x1x24xf32>
    %cst_16 = arith.constant dense<0.000000e+00> : vector<8x1xf32>
    %32 = vector.multi_reduction <add>, %31, %cst_16 [2] : vector<8x1x24xf32> to vector<8x1xf32>
    %33 = vector.shape_cast %32 : vector<8x1xf32> to vector<8x1x1xf32>
    %34 = vector.broadcast %33 : vector<8x1x1xf32> to vector<8x1x24xf32>
    %35 = arith.divf %31, %34 : vector<8x1x24xf32>
    "tpu.trace_start"() <{level = 10 : i32, message = "bqk,bkd->bqd"}> : () -> ()
    %cst_17 = arith.constant dense<0.000000e+00> : vector<8x1x32xf32>
    %36 = tpu.matmul %35, %13, %cst_17 {dimension_numbers = #tpu.dot_dimension_numbers<[2], [1], [1], [2], [0, 0, 0, 1, 1, 2], [0], [0]>} : vector<8x1x24xf32>, vector<8x24x32xf32>, vector<8x1x32xf32> -> vector<8x1x32xf32>
    "tpu.trace_stop"() : () -> ()
    %37 = vector.shape_cast %36 : vector<8x1x32xf32> to vector<8x32xf32>
    %cst_18 = arith.constant 0.000000e+00 : f32
    %38 = vector.broadcast %cst_18 : f32 to vector<8x32xf32>
    %39 = arith.maximumf %37, %38 : vector<8x32xf32>
    %c0_19 = arith.constant 0 : index
    %c0_20 = arith.constant 0 : index
    %40 = vector.load %arg7[%c0_19, %c0_20] : memref<32x32xf32, #tpu.memory_space<vmem>>, vector<32x32xf32>
    %cst_21 = arith.constant dense<0.000000e+00> : vector<8x32xf32>
    %41 = tpu.matmul %39, %40, %cst_21 {dimension_numbers = #tpu.dot_dimension_numbers<[1], [0], [0], [1], [0, 0, 1, 1], [], []>} : vector<8x32xf32>, vector<32x32xf32>, vector<8x32xf32> -> vector<8x32xf32>
    %c0_22 = arith.constant 0 : index
    %c0_23 = arith.constant 0 : index
    %42 = vector.load %arg8[%c0_22, %c0_23] : memref<1x32xf32, #tpu.memory_space<vmem>>, vector<1x32xf32>
    %43 = vector.broadcast %42 : vector<1x32xf32> to vector<8x32xf32>
    %44 = arith.addf %41, %43 : vector<8x32xf32>
    %c0_24 = arith.constant 0 : index
    %c0_25 = arith.constant 0 : index
    %45 = vector.load %arg2[%c0_24, %c0_25] : memref<8x8xf32, #tpu.memory_space<vmem>>, vector<8x8xf32>
    %c0_26 = arith.constant 0 : index
    %c0_27 = arith.constant 0 : index
    %46 = vector.load %arg9[%c0_26, %c0_27] : memref<8x32xf32, #tpu.memory_space<vmem>>, vector<8x32xf32>
    %cst_28 = arith.constant dense<0.000000e+00> : vector<8x32xf32>
    %47 = tpu.matmul %45, %46, %cst_28 {dimension_numbers = #tpu.dot_dimension_numbers<[1], [0], [0], [1], [0, 0, 1, 1], [], []>} : vector<8x8xf32>, vector<8x32xf32>, vector<8x32xf32> -> vector<8x32xf32>
    %c0_29 = arith.constant 0 : index
    %c0_30 = arith.constant 0 : index
    %48 = vector.load %arg10[%c0_29, %c0_30] : memref<1x32xf32, #tpu.memory_space<vmem>>, vector<1x32xf32>
    %49 = vector.broadcast %48 : vector<1x32xf32> to vector<8x32xf32>
    %50 = arith.addf %47, %49 : vector<8x32xf32>
    %c0_31 = arith.constant 0 : index
    %c0_32 = arith.constant 0 : index
    %51 = vector.load %arg11[%c0_31, %c0_32] : memref<1x32xf32, #tpu.memory_space<vmem>>, vector<1x32xf32>
    %52 = vector.broadcast %51 : vector<1x32xf32> to vector<8x32xf32>
    %53 = arith.mulf %44, %52 : vector<8x32xf32>
    %c0_33 = arith.constant 0 : index
    %c0_34 = arith.constant 0 : index
    %54 = vector.load %arg12[%c0_33, %c0_34] : memref<1x32xf32, #tpu.memory_space<vmem>>, vector<1x32xf32>
    %55 = vector.broadcast %54 : vector<1x32xf32> to vector<8x32xf32>
    %56 = arith.mulf %50, %55 : vector<8x32xf32>
    %57 = arith.addf %53, %56 : vector<8x32xf32>
    %cst_35 = arith.constant dense<0.000000e+00> : vector<8xf32>
    %58 = vector.multi_reduction <add>, %57, %cst_35 [1] : vector<8x32xf32> to vector<8xf32>
    %59 = vector.shape_cast %58 : vector<8xf32> to vector<8x1xf32>
    %c0_36 = arith.constant 0 : index
    %c0_37 = arith.constant 0 : index
    %60 = vector.load %arg13[%c0_36, %c0_37] : memref<1x1xf32, #tpu.memory_space<vmem>>, vector<1x1xf32>
    %61 = vector.broadcast %60 : vector<1x1xf32> to vector<8x1xf32>
    %62 = arith.addf %59, %61 : vector<8x1xf32>
    %63 = vector.shape_cast %62 : vector<8x1xf32> to vector<1x1x8xf32>
    %c0_38 = arith.constant 0 : index
    %c0_39 = arith.constant 0 : index
    %c0_40 = arith.constant 0 : index
    %64 = vector.load %arg14[%c0_38, %c0_39, %c0_40] : memref<1x1x8xf32, #tpu.memory_space<vmem>>, vector<1x1x8xf32>
    tpu.vector_store %arg14[%c0_38, %c0_39, %c0_40], %63 {strides = array<i32>} : memref<1x1x8xf32, #tpu.memory_space<vmem>>, vector<1x1x8xf32>,
    return
  }
  func.func @transform_0(%arg0: i32) -> (i32, i32, i32) {
    %c0_i32 = arith.constant 0 : i32
    %c0_i32_0 = arith.constant 0 : i32
    %c0_i32_1 = arith.constant 0 : i32
    return %arg0, %c0_i32, %c0_i32_0 : i32, i32, i32
  }
  func.func @transform_1(%arg0: i32) -> (i32, i32) {
    %c0_i32 = arith.constant 0 : i32
    %c0_i32_0 = arith.constant 0 : i32
    return %arg0, %c0_i32 : i32, i32
  }
  func.func @transform_2(%arg0: i32) -> (i32, i32) {
    %c0_i32 = arith.constant 0 : i32
    %c0_i32_0 = arith.constant 0 : i32
    %c0_i32_1 = arith.constant 0 : i32
    return %c0_i32, %c0_i32_0 : i32, i32
  }
  func.func @transform_3(%arg0: i32) -> (i32, i32) {
    %c0_i32 = arith.constant 0 : i32
    %c0_i32_0 = arith.constant 0 : i32
    %c0_i32_1 = arith.constant 0 : i32
    return %c0_i32, %c0_i32_0 : i32, i32
  }
  func.func @transform_4(%arg0: i32) -> (i32, i32) {
    %c0_i32 = arith.constant 0 : i32
    %c0_i32_0 = arith.constant 0 : i32
    %c0_i32_1 = arith.constant 0 : i32
    return %c0_i32, %c0_i32_0 : i32, i32
  }
  func.func @transform_5(%arg0: i32) -> (i32, i32) {
    %c0_i32 = arith.constant 0 : i32
    %c0_i32_0 = arith.constant 0 : i32
    %c0_i32_1 = arith.constant 0 : i32
    return %c0_i32, %c0_i32_0 : i32, i32
  }
  func.func @transform_6(%arg0: i32) -> (i32, i32) {
    %c0_i32 = arith.constant 0 : i32
    %c0_i32_0 = arith.constant 0 : i32
    %c0_i32_1 = arith.constant 0 : i32
    return %c0_i32, %c0_i32_0 : i32, i32
  }
  func.func @transform_7(%arg0: i32) -> (i32, i32) {
    %c0_i32 = arith.constant 0 : i32
    %c0_i32_0 = arith.constant 0 : i32
    %c0_i32_1 = arith.constant 0 : i32
    return %c0_i32, %c0_i32_0 : i32, i32
  }
  func.func @transform_8(%arg0: i32) -> (i32, i32) {
    %c0_i32 = arith.constant 0 : i32
    %c0_i32_0 = arith.constant 0 : i32
    %c0_i32_1 = arith.constant 0 : i32
    return %c0_i32, %c0_i32_0 : i32, i32
  }
  func.func @transform_9(%arg0: i32) -> (i32, i32) {
    %c0_i32 = arith.constant 0 : i32
    %c0_i32_0 = arith.constant 0 : i32
    %c0_i32_1 = arith.constant 0 : i32
    return %c0_i32, %c0_i32_0 : i32, i32
  }
  func.func @transform_10(%arg0: i32) -> (i32, i32) {
    %c0_i32 = arith.constant 0 : i32
    %c0_i32_0 = arith.constant 0 : i32
    %c0_i32_1 = arith.constant 0 : i32
    return %c0_i32, %c0_i32_0 : i32, i32
  }
  func.func @transform_11(%arg0: i32) -> (i32, i32) {
    %c0_i32 = arith.constant 0 : i32
    %c0_i32_0 = arith.constant 0 : i32
    %c0_i32_1 = arith.constant 0 : i32
    return %c0_i32, %c0_i32_0 : i32, i32
  }
  func.func @transform_12(%arg0: i32) -> (i32, i32) {
    %c0_i32 = arith.constant 0 : i32
    %c0_i32_0 = arith.constant 0 : i32
    %c0_i32_1 = arith.constant 0 : i32
    return %c0_i32, %c0_i32_0 : i32, i32
  }
  func.func @transform_13(%arg0: i32) -> (i32, i32, i32) {
    %c0_i32 = arith.constant 0 : i32
    %c0_i32_0 = arith.constant 0 : i32
    %c0_i32_1 = arith.constant 0 : i32
    return %arg0, %c0_i32, %c0_i32_0 : i32, i32, i32
  }
}

</mosaic_0001>

<llo_original>
// kernel: tpu_custom_call.1
$region0: #{tpu_custom_call.1}
  #allocation0 [shape = 'u32[]', space=smem, size = 0x4, offset = 0x4, fixed_abs, tag = 'smem constant byte address 0x4 - core index']
  #allocation1 [shape = 'u32[144,128]{1,0:T(1,128)}', space=vmem, size = 0x12000, scoped, tag = 'internal scratch']
  #allocation2 [shape = 'f32[1,1]{1,0:T(1,128)S(1)}', space=vmem, size = 0x200, scoped, tag = 'scoped memory for tpu_custom_call.1']
  %s0 = inlined_call_operand.vmem [shape: f32[8,24,16], index: 0, kind: input, shape index: {}]
  %s1 = inlined_call_operand.vmem [shape: f32[8,8], index: 1, kind: input, shape index: {}]
  %s2 = inlined_call_operand.vmem [shape: f32[16,32], index: 2, kind: input, shape index: {}]
  %s3 = inlined_call_operand.vmem [shape: f32[1,32], index: 3, kind: input, shape index: {}]
  %s4 = inlined_call_operand.vmem [shape: f32[32,32], index: 4, kind: input, shape index: {}]
  %s5 = inlined_call_operand.vmem [shape: f32[32,64], index: 5, kind: input, shape index: {}]
  %s6 = inlined_call_operand.vmem [shape: f32[32,32], index: 6, kind: input, shape index: {}]
  %s7 = inlined_call_operand.vmem [shape: f32[1,32], index: 7, kind: input, shape index: {}]
  %s8 = inlined_call_operand.vmem [shape: f32[8,32], index: 8, kind: input, shape index: {}]
  %s9 = inlined_call_operand.vmem [shape: f32[1,32], index: 9, kind: input, shape index: {}]
  %s10 = inlined_call_operand.vmem [shape: f32[1,32], index: 10, kind: input, shape index: {}]
  %s11 = inlined_call_operand.vmem [shape: f32[1,32], index: 11, kind: input, shape index: {}]
  %s12 = inlined_call_operand.<no memory space> [shape: f32[1,1], index: 12, kind: input, shape index: {}]
  %s13 = inlined_call_operand.hbm [shape: f32[1,1,8], index: 13, kind: output, shape index: {}]
  %s14 = sld [smem:[#allocation0]]
  $region62: #{tpu_custom_call.1} parent=0
    _
  %s16 = ssub.s32 1, %s14
  %s17 = scalar_select 0, %s16, %s14
  %v18 = vstv %s12
  %19 = vst [vmem:[#allocation2] sm:$0x1] %v18
  $region1: #{tpu_custom_call.1} parent=0
    #allocation3 [shape = 'u8[512]{0}', space=vmem, size = 0x400, scoped, tag = 'output window, operand 0, single buffered']
    #allocation4 [shape = 's32[1]{0}', space=sflag, size = 0x4, scoped, tag = 'scoped memory for tpu_custom_call.1']
    %20 = vsyncpa [#allocation4], 0
    // Predicated region
    $region2: #{tpu_custom_call.1} parent=1 // pred_check
      _
    $region3: #{tpu_custom_call.1} parent=1 // pred_check_branch
      %22 = sbr.rel (0) target = $region5
    $region4: #{tpu_custom_call.1} parent=1 // pred_region
      _
    $region5: #{tpu_custom_call.1} parent=1 // pred_fallthru
      _
    // Predicated region
    $region6: #{tpu_custom_call.1} parent=1 // pred_check
      _
    $region7: #{tpu_custom_call.1} parent=1 // pred_check_branch
      %24 = sbr.rel (0) target = $region9
    $region8: #{tpu_custom_call.1} parent=1 // pred_region
      _
    $region9: #{tpu_custom_call.1} parent=1 // pred_fallthru
      _
    // Predicated region
    $region10: #{tpu_custom_call.1} parent=1 // pred_check
      _
    $region11: #{tpu_custom_call.1} parent=1 // pred_check_branch
      %26 = sbr.rel (0) target = $region13
    $region12: #{tpu_custom_call.1} parent=1 // pred_region
      _
    $region13: #{tpu_custom_call.1} parent=1 // pred_fallthru
      _
    // Predicated region
    $region14: #{tpu_custom_call.1} parent=1 // pred_check
      _
    $region15: #{tpu_custom_call.1} parent=1 // pred_check_branch
      %28 = sbr.rel (0) target = $region17
    $region16: #{tpu_custom_call.1} parent=1 // pred_region
      _
    $region17: #{tpu_custom_call.1} parent=1 // pred_fallthru
      _
    // Predicated region
    $region18: #{tpu_custom_call.1} parent=1 // pred_check
      _
    $region19: #{tpu_custom_call.1} parent=1 // pred_check_branch
      %30 = sbr.rel (0) target = $region21
    $region20: #{tpu_custom_call.1} parent=1 // pred_region
      _
    $region21: #{tpu_custom_call.1} parent=1 // pred_fallthru
      _
    // Predicated region
    $region22: #{tpu_custom_call.1} parent=1 // pred_check
      _
    $region23: #{tpu_custom_call.1} parent=1 // pred_check_branch
      %32 = sbr.rel (0) target = $region25
    $region24: #{tpu_custom_call.1} parent=1 // pred_region
      _
    $region25: #{tpu_custom_call.1} parent=1 // pred_fallthru
      _
    // Predicated region
    $region26: #{tpu_custom_call.1} parent=1 // pred_check
      _
    $region27: #{tpu_custom_call.1} parent=1 // pred_check_branch
      %34 = sbr.rel (0) target = $region29
    $region28: #{tpu_custom_call.1} parent=1 // pred_region
      _
    $region29: #{tpu_custom_call.1} parent=1 // pred_fallthru
      _
    // Predicated region
    $region30: #{tpu_custom_call.1} parent=1 // pred_check
      _
    $region31: #{tpu_custom_call.1} parent=1 // pred_check_branch
      %36 = sbr.rel (0) target = $region33
    $region32: #{tpu_custom_call.1} parent=1 // pred_region
      _
    $region33: #{tpu_custom_call.1} parent=1 // pred_fallthru
      _
    // Predicated region
    $region34: #{tpu_custom_call.1} parent=1 // pred_check
      _
    $region35: #{tpu_custom_call.1} parent=1 // pred_check_branch
      %38 = sbr.rel (0) target = $region37
    $region36: #{tpu_custom_call.1} parent=1 // pred_region
      _
    $region37: #{tpu_custom_call.1} parent=1 // pred_fallthru
      _
    // Predicated region
    $region38: #{tpu_custom_call.1} parent=1 // pred_check
      _
    $region39: #{tpu_custom_call.1} parent=1 // pred_check_branch
      %40 = sbr.rel (0) target = $region41
    $region40: #{tpu_custom_call.1} parent=1 // pred_region
      _
    $region41: #{tpu_custom_call.1} parent=1 // pred_fallthru
      _
    // Predicated region
    $region42: #{tpu_custom_call.1} parent=1 // pred_check
      _
    $region43: #{tpu_custom_call.1} parent=1 // pred_check_branch
      %42 = sbr.rel (0) target = $region45
    $region44: #{tpu_custom_call.1} parent=1 // pred_region
      _
    $region45: #{tpu_custom_call.1} parent=1 // pred_fallthru
      _
    // Predicated region
    $region46: #{tpu_custom_call.1} parent=1 // pred_check
      _
    $region47: #{tpu_custom_call.1} parent=1 // pred_check_branch
      %44 = sbr.rel (0) target = $region49
    $region48: #{tpu_custom_call.1} parent=1 // pred_region
      _
    $region49: #{tpu_custom_call.1} parent=1 // pred_fallthru
      _
    // Predicated region
    $region50: #{tpu_custom_call.1} parent=1 // pred_check
      _
    $region51: #{tpu_custom_call.1} parent=1 // pred_check_branch
      %46 = sbr.rel (0) target = $region53
    $region52: #{tpu_custom_call.1} parent=1 // pred_region
      _
    $region53: #{tpu_custom_call.1} parent=1 // pred_fallthru
      _
    %v47 = vld [vmem:[%s0] sm:$0xff]
    %v48 = vld [vmem:[%s0 + $0x8] sm:$0xff]
    %v49 = vld [vmem:[%s0 + $0x10] sm:$0xff]
    %v50 = vld [vmem:[%s0 + $0x18] sm:$0xff]
    %v51 = vld [vmem:[%s0 + $0x20] sm:$0xff]
    %v52 = vld [vmem:[%s0 + $0x28] sm:$0xff]
    %v53 = vld [vmem:[%s0 + $0x30] sm:$0xff]
    %v54 = vld [vmem:[%s0 + $0x38] sm:$0xff]
    %v55 = vld [vmem:[%s0 + $0x40] sm:$0xff]
    %v56 = vld [vmem:[%s0 + $0x48] sm:$0xff]
    %v57 = vld [vmem:[%s0 + $0x50] sm:$0xff]
    %v58 = vld [vmem:[%s0 + $0x58] sm:$0xff]
    %v59 = vld [vmem:[%s0 + $0x60] sm:$0xff]
    %v60 = vld [vmem:[%s0 + $0x68] sm:$0xff]
    %v61 = vld [vmem:[%s0 + $0x70] sm:$0xff]
    %v62 = vld [vmem:[%s0 + $0x78] sm:$0xff]
    %v63 = vld [vmem:[%s0 + $0x80] sm:$0xff]
    %v64 = vld [vmem:[%s0 + $0x88] sm:$0xff]
    %v65 = vld [vmem:[%s0 + $0x90] sm:$0xff]
    %v66 = vld [vmem:[%s0 + $0x98] sm:$0xff]
    %v67 = vld [vmem:[%s0 + $0xa0] sm:$0xff]
    %v68 = vld [vmem:[%s0 + $0xa8] sm:$0xff]
    %v69 = vld [vmem:[%s0 + $0xb0] sm:$0xff]
    %v70 = vld [vmem:[%s0 + $0xb8] sm:$0xff]
    %v71 = vld [vmem:[%s2] sm:$0xff]
    %v72 = vld [vmem:[%s2 + $0x8] sm:$0xff]
    %v73 = vld [vmem:[%s3] sm:$0x1]
    %v75 = vlaneseq
    %v76 = vshrl.u32 %v75, 7
    %v77 = vsub.s32 0, %v76
    %v78 = vrot.slane %v73, %v77
    %vm80 = vcmask 130048
    %v82 = vsel %vm80, %v47, 0
    %v85 = vsel %vm80, %v48, 0
    %v88 = vsel %vm80, %v49, 0
    %v91 = vsel %vm80, %v50, 0
    %v94 = vsel %vm80, %v51, 0
    %v97 = vsel %vm80, %v52, 0
    %v100 = vsel %vm80, %v53, 0
    %v103 = vsel %vm80, %v54, 0
    %v106 = vsel %vm80, %v55, 0
    %v109 = vsel %vm80, %v56, 0
    %v112 = vsel %vm80, %v57, 0
    %v115 = vsel %vm80, %v58, 0
    %v118 = vsel %vm80, %v59, 0
    %v121 = vsel %vm80, %v60, 0
    %v124 = vsel %vm80, %v61, 0
    %v127 = vsel %vm80, %v62, 0
    %v130 = vsel %vm80, %v63, 0
    %v133 = vsel %vm80, %v64, 0
    %v136 = vsel %vm80, %v65, 0
    %v139 = vsel %vm80, %v66, 0
    %v142 = vsel %vm80, %v67, 0
    %v145 = vsel %vm80, %v68, 0
    %v148 = vsel %vm80, %v69, 0
    %v151 = vsel %vm80, %v70, 0
    %153 = vmatprep.subr.mxu0 0.0
    %154 = vmatpush1.msra.mxu0 0.0
    %155 = vmatprep.subr.mxu0 0.0
    %156 = vmatpush1.msra.mxu0 0.0
    %157 = vmatprep.subr.mxu0 0.0
    %158 = vmatpush1.msra.mxu0 0.0
    %159 = vmatprep.subr.mxu0 0.0
    %160 = vmatpush1.msra.mxu0 0.0
    %161 = vmatprep.subr.mxu0 0.0
    %162 = vmatpush1.msra.mxu0 0.0
    %163 = vmatprep.subr.mxu0 0.0
    %164 = vmatpush1.msra.mxu0 0.0
    %165 = vmatprep.subr.mxu0 0.0
    %166 = vmatpush1.msra.mxu0 0.0
    %167 = vmatprep.subr.mxu0 0.0
    %168 = vmatpush1.msra.mxu0 0.0
    %169 = vmatprep.subr.mxu0 0.0
    %170 = vmatpush1.msra.mxu0 0.0
    %171 = vmatprep.subr.mxu0 0.0
    %172 = vmatpush1.msra.mxu0 0.0
    %173 = vmatprep.subr.mxu0 0.0
    %174 = vmatpush1.msra.mxu0 0.0
    %175 = vmatprep.subr.mxu0 0.0
    %176 = vmatpush1.msra.mxu0 0.0
    %177 = vmatprep.subr.mxu0 0.0
    %178 = vmatpush1.msra.mxu0 0.0
    %179 = vmatprep.subr.mxu0 0.0
    %180 = vmatpush1.msra.mxu0 0.0
    %181 = vmatprep.subr.mxu0 0.0
    %182 = vmatpush1.msra.mxu0 %v72
    %183 = vmatprep.subr.mxu0 0.0
    %184 = vmatpush1.msra.mxu0 %v71
    %185 = vmatprep.subr.mxu0 0.0
    %186 = vmatpush2.msra.mxu0 0.0
    %187 = vmatprep.subr.mxu0 0.0
    %188 = vmatpush2.msra.mxu0 0.0
    %189 = vmatprep.subr.mxu0 0.0
    %190 = vmatpush2.msra.mxu0 0.0
    %191 = vmatprep.subr.mxu0 0.0
    %192 = vmatpush2.msra.mxu0 0.0
    %193 = vmatprep.subr.mxu0 0.0
    %194 = vmatpush2.msra.mxu0 0.0
    %195 = vmatprep.subr.mxu0 0.0
    %196 = vmatpush2.msra.mxu0 0.0
    %197 = vmatprep.subr.mxu0 0.0
    %198 = vmatpush2.msra.mxu0 0.0
    %199 = vmatprep.subr.mxu0 0.0
    %200 = vmatpush2.msra.mxu0 0.0
    %201 = vmatprep.subr.mxu0 0.0
    %202 = vmatpush2.msra.mxu0 0.0
    %203 = vmatprep.subr.mxu0 0.0
    %204 = vmatpush2.msra.mxu0 0.0
    %205 = vmatprep.subr.mxu0 0.0
    %206 = vmatpush2.msra.mxu0 0.0
    %207 = vmatprep.subr.mxu0 0.0
    %208 = vmatpush2.msra.mxu0 0.0
    %209 = vmatprep.subr.mxu0 0.0
    %210 = vmatpush2.msra.mxu0 0.0
    %211 = vmatprep.subr.mxu0 0.0
    %212 = vmatpush2.msra.mxu0 0.0
    %213 = vmatprep.subr.mxu0 0.0
    %214 = vmatpush2.msra.mxu0 0.0
    %215 = vmatprep.subr.mxu0 0.0
    %216 = vmatpush2.msra.mxu0 0.0
    %217 = vmatprep.mubr.f32.mxu0 0.0
    %218 = vmatmul.mubr.f32.gmra.mxu0 %v82
    %v219 = vpop.f32.mrf.mxu0
    %v220 = vadd.f32 %v78, %v219
    %v221 = vpop.f32.mrf.mxu0
    %222 = vmatprep.mubr.f32.mxu0 0.0
    %223 = vmatmul.mubr.f32.gmra.mxu0 %v85
    %v224 = vpop.f32.mrf.mxu0
    %v225 = vadd.f32 %v78, %v224
    %v226 = vpop.f32.mrf.mxu0
    %227 = vmatprep.mubr.f32.mxu0 0.0
    %228 = vmatmul.mubr.f32.gmra.mxu0 %v88
    %v229 = vpop.f32.mrf.mxu0
    %v230 = vadd.f32 %v78, %v229
    %v231 = vpop.f32.mrf.mxu0
    %232 = vmatprep.mubr.f32.mxu0 0.0
    %233 = vmatmul.mubr.f32.gmra.mxu0 %v91
    %v234 = vpop.f32.mrf.mxu0
    %v235 = vadd.f32 %v78, %v234
    %v236 = vpop.f32.mrf.mxu0
    %237 = vmatprep.mubr.f32.mxu0 0.0
    %238 = vmatmul.mubr.f32.gmra.mxu0 %v94
    %v239 = vpop.f32.mrf.mxu0
    %v240 = vadd.f32 %v78, %v239
    %v241 = vpop.f32.mrf.mxu0
    %242 = vmatprep.mubr.f32.mxu0 0.0
    %243 = vmatmul.mubr.f32.gmra.mxu0 %v97
    %v244 = vpop.f32.mrf.mxu0
    %v245 = vadd.f32 %v78, %v244
    %v246 = vpop.f32.mrf.mxu0
    %247 = vmatprep.mubr.f32.mxu0 0.0
    %248 = vmatmul.mubr.f32.gmra.mxu0 %v100
    %v249 = vpop.f32.mrf.mxu0
    %v250 = vadd.f32 %v78, %v249
    %v251 = vpop.f32.mrf.mxu0
    %252 = vmatprep.mubr.f32.mxu0 0.0
    %253 = vmatmul.mubr.f32.gmra.mxu0 %v103
    %v254 = vpop.f32.mrf.mxu0
    %v255 = vadd.f32 %v78, %v254
    %v256 = vpop.f32.mrf.mxu0
    %257 = vmatprep.mubr.f32.mxu0 0.0
    %258 = vmatmul.mubr.f32.gmra.mxu0 %v106
    %v259 = vpop.f32.mrf.mxu0
    %v260 = vadd.f32 %v78, %v259
    %v261 = vpop.f32.mrf.mxu0
    %262 = vmatprep.mubr.f32.mxu0 0.0
    %263 = vmatmul.mubr.f32.gmra.mxu0 %v109
    %v264 = vpop.f32.mrf.mxu0
    %v265 = vadd.f32 %v78, %v264
    %v266 = vpop.f32.mrf.mxu0
    %267 = vmatprep.mubr.f32.mxu0 0.0
    %268 = vmatmul.mubr.f32.gmra.mxu0 %v112
    %v269 = vpop.f32.mrf.mxu0
    %v270 = vadd.f32 %v78, %v269
    %v271 = vpop.f32.mrf.mxu0
    %272 = vmatprep.mubr.f32.mxu0 0.0
    %273 = vmatmul.mubr.f32.gmra.mxu0 %v115
    %v274 = vpop.f32.mrf.mxu0
    %v275 = vadd.f32 %v78, %v274
    %v276 = vpop.f32.mrf.mxu0
    %277 = vmatprep.mubr.f32.mxu0 0.0
    %278 = vmatmul.mubr.f32.gmra.mxu0 %v118
    %v279 = vpop.f32.mrf.mxu0
    %v280 = vadd.f32 %v78, %v279
    %v281 = vpop.f32.mrf.mxu0
    %282 = vmatprep.mubr.f32.mxu0 0.0
    %283 = vmatmul.mubr.f32.gmra.mxu0 %v121
    %v284 = vpop.f32.mrf.mxu0
    %v285 = vadd.f32 %v78, %v284
    %v286 = vpop.f32.mrf.mxu0
    %287 = vmatprep.mubr.f32.mxu0 0.0
    %288 = vmatmul.mubr.f32.gmra.mxu0 %v124
    %v289 = vpop.f32.mrf.mxu0
    %v290 = vadd.f32 %v78, %v289
    %v291 = vpop.f32.mrf.mxu0
    %292 = vmatprep.mubr.f32.mxu0 0.0
    %293 = vmatmul.mubr.f32.gmra.mxu0 %v127
    %v294 = vpop.f32.mrf.mxu0
    %v295 = vadd.f32 %v78, %v294
    %v296 = vpop.f32.mrf.mxu0
    %297 = vmatprep.mubr.f32.mxu0 0.0
    %298 = vmatmul.mubr.f32.gmra.mxu0 %v130
    %v299 = vpop.f32.mrf.mxu0
    %v300 = vadd.f32 %v78, %v299
    %v301 = vpop.f32.mrf.mxu0
    %302 = vmatprep.mubr.f32.mxu0 0.0
    %303 = vmatmul.mubr.f32.gmra.mxu0 %v133
    %v304 = vpop.f32.mrf.mxu0
    %v305 = vadd.f32 %v78, %v304
    %v306 = vpop.f32.mrf.mxu0
    %307 = vmatprep.mubr.f32.mxu0 0.0
    %308 = vmatmul.mubr.f32.gmra.mxu0 %v136
    %v309 = vpop.f32.mrf.mxu0
    %v310 = vadd.f32 %v78, %v309
    %v311 = vpop.f32.mrf.mxu0
    %312 = vmatprep.mubr.f32.mxu0 0.0
    %313 = vmatmul.mubr.f32.gmra.mxu0 %v139
    %v314 = vpop.f32.mrf.mxu0
    %v315 = vadd.f32 %v78, %v314
    %v316 = vpop.f32.mrf.mxu0
    %317 = vmatprep.mubr.f32.mxu0 0.0
    %318 = vmatmul.mubr.f32.gmra.mxu0 %v142
    %v319 = vpop.f32.mrf.mxu0
    %v320 = vadd.f32 %v78, %v319
    %v321 = vpop.f32.mrf.mxu0
    %322 = vmatprep.mubr.f32.mxu0 0.0
    %323 = vmatmul.mubr.f32.gmra.mxu0 %v145
    %v324 = vpop.f32.mrf.mxu0
    %v325 = vadd.f32 %v78, %v324
    %v326 = vpop.f32.mrf.mxu0
    %327 = vmatprep.mubr.f32.mxu0 0.0
    %328 = vmatmul.mubr.f32.gmra.mxu0 %v148
    %v329 = vpop.f32.mrf.mxu0
    %v330 = vadd.f32 %v78, %v329
    %v331 = vpop.f32.mrf.mxu0
    %332 = vmatprep.mubr.f32.mxu0 0.0
    %333 = vmatmul.mubr.f32.gmra.mxu0 %v151
    %v334 = vpop.f32.mrf.mxu0
    %v335 = vadd.f32 %v78, %v334
    %v336 = vpop.f32.mrf.mxu0
    %337 = vdwg.mxu0
    %v338 = vtanh.pop %v220
    %v339 = vtanh.pop %v225
    %v340 = vtanh.pop %v230
    %v341 = vtanh.pop %v235
    %v342 = vtanh.pop %v240
    %v343 = vtanh.pop %v245
    %v344 = vtanh.pop %v250
    %v345 = vtanh.pop %v255
    %v346 = vtanh.pop %v260
    %v347 = vtanh.pop %v265
    %v348 = vtanh.pop %v270
    %v349 = vtanh.pop %v275
    %v350 = vtanh.pop %v280
    %v351 = vtanh.pop %v285
    %v352 = vtanh.pop %v290
    %v353 = vtanh.pop %v295
    %v354 = vtanh.pop %v300
    %v355 = vtanh.pop %v305
    %v356 = vtanh.pop %v310
    %v357 = vtanh.pop %v315
    %v358 = vtanh.pop %v320
    %v359 = vtanh.pop %v325
    %v360 = vtanh.pop %v330
    %v361 = vtanh.pop %v335
    %v362 = vld [vmem:[%s5] sm:$0xff]
    %v363 = vld [vmem:[%s5 + $0x8] sm:$0xff]
    %v364 = vld [vmem:[%s5 + $0x10] sm:$0xff]
    %v365 = vld [vmem:[%s5 + $0x18] sm:$0xff]
    %vm366 = vcmask 261120
    %v368 = vsel %vm366, %v338, 0
    %v371 = vsel %vm366, %v339, 0
    %v374 = vsel %vm366, %v340, 0
    %v377 = vsel %vm366, %v341, 0
    %v380 = vsel %vm366, %v342, 0
    %v383 = vsel %vm366, %v343, 0
    %v386 = vsel %vm366, %v344, 0
    %v389 = vsel %vm366, %v345, 0
    %v392 = vsel %vm366, %v346, 0
    %v395 = vsel %vm366, %v347, 0
    %v398 = vsel %vm366, %v348, 0
    %v401 = vsel %vm366, %v349, 0
    %v404 = vsel %vm366, %v350, 0
    %v407 = vsel %vm366, %v351, 0
    %v410 = vsel %vm366, %v352, 0
    %v413 = vsel %vm366, %v353, 0
    %v416 = vsel %vm366, %v354, 0
    %v419 = vsel %vm366, %v355, 0
    %v422 = vsel %vm366, %v356, 0
    %v425 = vsel %vm366, %v357, 0
    %v428 = vsel %vm366, %v358, 0
    %v431 = vsel %vm366, %v359, 0
    %v434 = vsel %vm366, %v360, 0
    %v437 = vsel %vm366, %v361, 0
    %439 = vmatprep.subr.mxu0 0.0
    %440 = vmatpush1.msra.mxu0 0.0
    %441 = vmatprep.subr.mxu0 0.0
    %442 = vmatpush1.msra.mxu0 0.0
    %443 = vmatprep.subr.mxu0 0.0
    %444 = vmatpush1.msra.mxu0 0.0
    %445 = vmatprep.subr.mxu0 0.0
    %446 = vmatpush1.msra.mxu0 0.0
    %447 = vmatprep.subr.mxu0 0.0
    %448 = vmatpush1.msra.mxu0 0.0
    %449 = vmatprep.subr.mxu0 0.0
    %450 = vmatpush1.msra.mxu0 0.0
    %451 = vmatprep.subr.mxu0 0.0
    %452 = vmatpush1.msra.mxu0 0.0
    %453 = vmatprep.subr.mxu0 0.0
    %454 = vmatpush1.msra.mxu0 0.0
    %455 = vmatprep.subr.mxu0 0.0
    %456 = vmatpush1.msra.mxu0 0.0
    %457 = vmatprep.subr.mxu0 0.0
    %458 = vmatpush1.msra.mxu0 0.0
    %459 = vmatprep.subr.mxu0 0.0
    %460 = vmatpush1.msra.mxu0 0.0
    %461 = vmatprep.subr.mxu0 0.0
    %462 = vmatpush1.msra.mxu0 0.0
    %463 = vmatprep.subr.mxu0 0.0
    %464 = vmatpush1.msra.mxu0 %v365
    %465 = vmatprep.subr.mxu0 0.0
    %466 = vmatpush1.msra.mxu0 %v364
    %467 = vmatprep.subr.mxu0 0.0
    %468 = vmatpush1.msra.mxu0 %v363
    %469 = vmatprep.subr.mxu0 0.0
    %470 = vmatpush1.msra.mxu0 %v362
    %471 = vmatprep.subr.mxu0 0.0
    %472 = vmatpush2.msra.mxu0 0.0
    %473 = vmatprep.subr.mxu0 0.0
    %474 = vmatpush2.msra.mxu0 0.0
    %475 = vmatprep.subr.mxu0 0.0
    %476 = vmatpush2.msra.mxu0 0.0
    %477 = vmatprep.subr.mxu0 0.0
    %478 = vmatpush2.msra.mxu0 0.0
    %479 = vmatprep.subr.mxu0 0.0
    %480 = vmatpush2.msra.mxu0 0.0
    %481 = vmatprep.subr.mxu0 0.0
    %482 = vmatpush2.msra.mxu0 0.0
    %483 = vmatprep.subr.mxu0 0.0
    %484 = vmatpush2.msra.mxu0 0.0
    %485 = vmatprep.subr.mxu0 0.0
    %486 = vmatpush2.msra.mxu0 0.0
    %487 = vmatprep.subr.mxu0 0.0
    %488 = vmatpush2.msra.mxu0 0.0
    %489 = vmatprep.subr.mxu0 0.0
    %490 = vmatpush2.msra.mxu0 0.0
    %491 = vmatprep.subr.mxu0 0.0
    %492 = vmatpush2.msra.mxu0 0.0
    %493 = vmatprep.subr.mxu0 0.0
    %494 = vmatpush2.msra.mxu0 0.0
    %495 = vmatprep.subr.mxu0 0.0
    %496 = vmatpush2.msra.mxu0 0.0
    %497 = vmatprep.subr.mxu0 0.0
    %498 = vmatpush2.msra.mxu0 0.0
    %499 = vmatprep.subr.mxu0 0.0
    %500 = vmatpush2.msra.mxu0 0.0
    %501 = vmatprep.subr.mxu0 0.0
    %502 = vmatpush2.msra.mxu0 0.0
    %503 = vmatprep.mubr.f32.mxu0 0.0
    %504 = vmatmul.mubr.f32.gmra.mxu0 %v368
    %v505 = vpop.f32.mrf.mxu0
    %v506 = vadd.f32 0.0, %v505
    %v507 = vpop.f32.mrf.mxu0
    %508 = vmatprep.mubr.f32.mxu0 0.0
    %509 = vmatmul.mubr.f32.gmra.mxu0 %v371
    %v510 = vpop.f32.mrf.mxu0
    %v511 = vadd.f32 0.0, %v510
    %v512 = vpop.f32.mrf.mxu0
    %513 = vmatprep.mubr.f32.mxu0 0.0
    %514 = vmatmul.mubr.f32.gmra.mxu0 %v374
    %v515 = vpop.f32.mrf.mxu0
    %v516 = vadd.f32 0.0, %v515
    %v517 = vpop.f32.mrf.mxu0
    %518 = vmatprep.mubr.f32.mxu0 0.0
    %519 = vmatmul.mubr.f32.gmra.mxu0 %v377
    %v520 = vpop.f32.mrf.mxu0
    %v521 = vadd.f32 0.0, %v520
    %v522 = vpop.f32.mrf.mxu0
    %523 = vmatprep.mubr.f32.mxu0 0.0
    %524 = vmatmul.mubr.f32.gmra.mxu0 %v380
    %v525 = vpop.f32.mrf.mxu0
    %v526 = vadd.f32 0.0, %v525
    %v527 = vpop.f32.mrf.mxu0
    %528 = vmatprep.mubr.f32.mxu0 0.0
    %529 = vmatmul.mubr.f32.gmra.mxu0 %v383
    %v530 = vpop.f32.mrf.mxu0
    %v531 = vadd.f32 0.0, %v530
    %v532 = vpop.f32.mrf.mxu0
    %533 = vmatprep.mubr.f32.mxu0 0.0
    %534 = vmatmul.mubr.f32.gmra.mxu0 %v386
    %v535 = vpop.f32.mrf.mxu0
    %v536 = vadd.f32 0.0, %v535
    %v537 = vpop.f32.mrf.mxu0
    %538 = vmatprep.mubr.f32.mxu0 0.0
    %539 = vmatmul.mubr.f32.gmra.mxu0 %v389
    %v540 = vpop.f32.mrf.mxu0
    %v541 = vadd.f32 0.0, %v540
    %v542 = vpop.f32.mrf.mxu0
    %543 = vmatprep.mubr.f32.mxu0 0.0
    %544 = vmatmul.mubr.f32.gmra.mxu0 %v392
    %v545 = vpop.f32.mrf.mxu0
    %v546 = vadd.f32 0.0, %v545
    %v547 = vpop.f32.mrf.mxu0
    %548 = vmatprep.mubr.f32.mxu0 0.0
    %549 = vmatmul.mubr.f32.gmra.mxu0 %v395
    %v550 = vpop.f32.mrf.mxu0
    %v551 = vadd.f32 0.0, %v550
    %v552 = vpop.f32.mrf.mxu0
    %553 = vmatprep.mubr.f32.mxu0 0.0
    %554 = vmatmul.mubr.f32.gmra.mxu0 %v398
    %v555 = vpop.f32.mrf.mxu0
    %v556 = vadd.f32 0.0, %v555
    %v557 = vpop.f32.mrf.mxu0
    %558 = vmatprep.mubr.f32.mxu0 0.0
    %559 = vmatmul.mubr.f32.gmra.mxu0 %v401
    %v560 = vpop.f32.mrf.mxu0
    %v561 = vadd.f32 0.0, %v560
    %v562 = vpop.f32.mrf.mxu0
    %563 = vmatprep.mubr.f32.mxu0 0.0
    %564 = vmatmul.mubr.f32.gmra.mxu0 %v404
    %v565 = vpop.f32.mrf.mxu0
    %v566 = vadd.f32 0.0, %v565
    %v567 = vpop.f32.mrf.mxu0
    %568 = vmatprep.mubr.f32.mxu0 0.0
    %569 = vmatmul.mubr.f32.gmra.mxu0 %v407
    %v570 = vpop.f32.mrf.mxu0
    %v571 = vadd.f32 0.0, %v570
    %v572 = vpop.f32.mrf.mxu0
    %573 = vmatprep.mubr.f32.mxu0 0.0
    %574 = vmatmul.mubr.f32.gmra.mxu0 %v410
    %v575 = vpop.f32.mrf.mxu0
    %v576 = vadd.f32 0.0, %v575
    %v577 = vpop.f32.mrf.mxu0
    %578 = vmatprep.mubr.f32.mxu0 0.0
    %579 = vmatmul.mubr.f32.gmra.mxu0 %v413
    %v580 = vpop.f32.mrf.mxu0
    %v581 = vadd.f32 0.0, %v580
    %v582 = vpop.f32.mrf.mxu0
    %583 = vmatprep.mubr.f32.mxu0 0.0
    %584 = vmatmul.mubr.f32.gmra.mxu0 %v416
    %v585 = vpop.f32.mrf.mxu0
    %v586 = vadd.f32 0.0, %v585
    %v587 = vpop.f32.mrf.mxu0
    %588 = vmatprep.mubr.f32.mxu0 0.0
    %589 = vmatmul.mubr.f32.gmra.mxu0 %v419
    %v590 = vpop.f32.mrf.mxu0
    %v591 = vadd.f32 0.0, %v590
    %v592 = vpop.f32.mrf.mxu0
    %593 = vmatprep.mubr.f32.mxu0 0.0
    %594 = vmatmul.mubr.f32.gmra.mxu0 %v422
    %v595 = vpop.f32.mrf.mxu0
    %v596 = vadd.f32 0.0, %v595
    %v597 = vpop.f32.mrf.mxu0
    %598 = vmatprep.mubr.f32.mxu0 0.0
    %599 = vmatmul.mubr.f32.gmra.mxu0 %v425
    %v600 = vpop.f32.mrf.mxu0
    %v601 = vadd.f32 0.0, %v600
    %v602 = vpop.f32.mrf.mxu0
    %603 = vmatprep.mubr.f32.mxu0 0.0
    %604 = vmatmul.mubr.f32.gmra.mxu0 %v428
    %v605 = vpop.f32.mrf.mxu0
    %v606 = vadd.f32 0.0, %v605
    %v607 = vpop.f32.mrf.mxu0
    %608 = vmatprep.mubr.f32.mxu0 0.0
    %609 = vmatmul.mubr.f32.gmra.mxu0 %v431
    %v610 = vpop.f32.mrf.mxu0
    %v611 = vadd.f32 0.0, %v610
    %v612 = vpop.f32.mrf.mxu0
    %613 = vmatprep.mubr.f32.mxu0 0.0
    %614 = vmatmul.mubr.f32.gmra.mxu0 %v434
    %v615 = vpop.f32.mrf.mxu0
    %v616 = vadd.f32 0.0, %v615
    %v617 = vpop.f32.mrf.mxu0
    %618 = vmatprep.mubr.f32.mxu0 0.0
    %619 = vmatmul.mubr.f32.gmra.mxu0 %v437
    %v620 = vpop.f32.mrf.mxu0
    %v621 = vadd.f32 0.0, %v620
    %v622 = vpop.f32.mrf.mxu0
    %623 = vdwg.mxu0
    %v624 = vld [vmem:[%s4] sm:$0xff]
    %v625 = vld [vmem:[%s4 + $0x8] sm:$0xff]
    %v626 = vld [vmem:[%s4 + $0x10] sm:$0xff]
    %v627 = vld [vmem:[%s4 + $0x18] sm:$0xff]
    %v628 = vrot.slane %v341, 7
    %vm629 = vcmask 1041409
    %v630 = vsel %vm629, %v628, %v338
    %v631 = vrot.slane %v344, 6
    %vm632 = vcmask 1042434
    %v633 = vsel %vm632, %v631, %v630
    %v634 = vrot.slane %v347, 5
    %vm635 = vcmask 1043459
    %v636 = vsel %vm635, %v634, %v633
    %v637 = vrot.slane %v350, 4
    %vm638 = vcmask 1044484
    %v639 = vsel %vm638, %v637, %v636
    %v640 = vrot.slane %v353, 3
    %vm641 = vcmask 1045509
    %v642 = vsel %vm641, %v640, %v639
    %v643 = vrot.slane %v356, 2
    %vm644 = vcmask 1046534
    %v645 = vsel %vm644, %v643, %v642
    %v646 = vrot.slane %v359, 1
    %vm647 = vcmask 1047559
    %v648 = vsel %vm647, %v646, %v645
    %v649 = vsel %vm366, %v648, 0
    %651 = vmatprep.subr.mxu0 0.0
    %652 = vmatpush1.msra.mxu0 0.0
    %653 = vmatprep.subr.mxu0 0.0
    %654 = vmatpush1.msra.mxu0 0.0
    %655 = vmatprep.subr.mxu0 0.0
    %656 = vmatpush1.msra.mxu0 0.0
    %657 = vmatprep.subr.mxu0 0.0
    %658 = vmatpush1.msra.mxu0 0.0
    %659 = vmatprep.subr.mxu0 0.0
    %660 = vmatpush1.msra.mxu0 0.0
    %661 = vmatprep.subr.mxu0 0.0
    %662 = vmatpush1.msra.mxu0 0.0
    %663 = vmatprep.subr.mxu0 0.0
    %664 = vmatpush1.msra.mxu0 0.0
    %665 = vmatprep.subr.mxu0 0.0
    %666 = vmatpush1.msra.mxu0 0.0
    %667 = vmatprep.subr.mxu0 0.0
    %668 = vmatpush1.msra.mxu0 0.0
    %669 = vmatprep.subr.mxu0 0.0
    %670 = vmatpush1.msra.mxu0 0.0
    %671 = vmatprep.subr.mxu0 0.0
    %672 = vmatpush1.msra.mxu0 0.0
    %673 = vmatprep.subr.mxu0 0.0
    %674 = vmatpush1.msra.mxu0 0.0
    %675 = vmatprep.subr.mxu0 0.0
    %676 = vmatpush1.msra.mxu0 %v627
    %677 = vmatprep.subr.mxu0 0.0
    %678 = vmatpush1.msra.mxu0 %v626
    %679 = vmatprep.subr.mxu0 0.0
    %680 = vmatpush1.msra.mxu0 %v625
    %681 = vmatprep.subr.mxu0 0.0
    %682 = vmatpush1.msra.mxu0 %v624
    %683 = vmatprep.subr.mxu0 0.0
    %684 = vmatpush2.msra.mxu0 0.0
    %685 = vmatprep.subr.mxu0 0.0
    %686 = vmatpush2.msra.mxu0 0.0
    %687 = vmatprep.subr.mxu0 0.0
    %688 = vmatpush2.msra.mxu0 0.0
    %689 = vmatprep.subr.mxu0 0.0
    %690 = vmatpush2.msra.mxu0 0.0
    %691 = vmatprep.subr.mxu0 0.0
    %692 = vmatpush2.msra.mxu0 0.0
    %693 = vmatprep.subr.mxu0 0.0
    %694 = vmatpush2.msra.mxu0 0.0
    %695 = vmatprep.subr.mxu0 0.0
    %696 = vmatpush2.msra.mxu0 0.0
    %697 = vmatprep.subr.mxu0 0.0
    %698 = vmatpush2.msra.mxu0 0.0
    %699 = vmatprep.subr.mxu0 0.0
    %700 = vmatpush2.msra.mxu0 0.0
    %701 = vmatprep.subr.mxu0 0.0
    %702 = vmatpush2.msra.mxu0 0.0
    %703 = vmatprep.subr.mxu0 0.0
    %704 = vmatpush2.msra.mxu0 0.0
    %705 = vmatprep.subr.mxu0 0.0
    %706 = vmatpush2.msra.mxu0 0.0
    %707 = vmatprep.subr.mxu0 0.0
    %708 = vmatpush2.msra.mxu0 0.0
    %709 = vmatprep.subr.mxu0 0.0
    %710 = vmatpush2.msra.mxu0 0.0
    %711 = vmatprep.subr.mxu0 0.0
    %712 = vmatpush2.msra.mxu0 0.0
    %713 = vmatprep.subr.mxu0 0.0
    %714 = vmatpush2.msra.mxu0 0.0
    %715 = vmatprep.mubr.f32.mxu0 0.0
    %716 = vmatmul.mubr.f32.gmra.mxu0 %v649
    %v717 = vpop.f32.mrf.mxu0
    %v718 = vadd.f32 0.0, %v717
    %v719 = vpop.f32.mrf.mxu0
    %720 = vdwg.mxu0
    %v722 = vcombine.high %v718, %v718
    %v724 = vunpack.c.l.s4 1966171168
    %v725 = vunpack.c.0.s8 %v724
    %v726 = vlaneseq
    %v727 = vshrl.u32 %v726, 7
    %v728 = vsub.s32 %v725, %v727
    %v729 = vrot.slane %v718, %v728
    %v731 = vunpack.c.l.s4 1966171168
    %v732 = vunpack.c.0.s8 %v731
    %v733 = vlaneseq
    %v734 = vshrl.u32 %v733, 7
    %v735 = vsub.s32 %v732, %v734
    %v736 = vrot.slane %v722, %v735
    %v737 = vcombine.high %v729, %v729
    %v738 = vcombine.high %v736, %v736
    %v740 = vunpack.c.l.s4 1966171168
    %v741 = vunpack.c.0.s8 %v740
    %v742 = vlaneseq
    %v743 = vshrl.u32 %v742, 7
    %v744 = vsub.s32 %v741, %v743
    %v745 = vrot.slane %v729, %v744
    %v747 = vunpack.c.l.s4 1966171168
    %v748 = vunpack.c.0.s8 %v747
    %v749 = vlaneseq
    %v750 = vshrl.u32 %v749, 7
    %v751 = vsub.s32 %v748, %v750
    %v752 = vrot.slane %v736, %v751
    %v754 = vunpack.c.l.s4 1966171168
    %v755 = vunpack.c.0.s8 %v754
    %v756 = vlaneseq
    %v757 = vshrl.u32 %v756, 7
    %v758 = vsub.s32 %v755, %v757
    %v759 = vrot.slane %v737, %v758
    %v761 = vunpack.c.l.s4 1966171168
    %v762 = vunpack.c.0.s8 %v761
    %v763 = vlaneseq
    %v764 = vshrl.u32 %v763, 7
    %v765 = vsub.s32 %v762, %v764
    %v766 = vrot.slane %v738, %v765
    %v767 = vcombine.high %v745, %v745
    %v768 = vcombine.high %v752, %v752
    %v769 = vcombine.high %v759, %v759
    %v770 = vcombine.high %v766, %v766
    %v771 = vsel %vm366, %v745, 0
    %v774 = vsel %vm366, %v506, 0
    %v777 = vsel %vm366, %v511, 0
    %v780 = vsel %vm366, %v516, 0
    %782 = vmatprep.subr.mxu0 0.0
    %783 = vmatpush1.xpose.msra.mxu0 0.0
    %784 = vmatprep.subr.mxu0 0.0
    %785 = vmatpush1.xpose.msra.mxu0 0.0
    %786 = vmatprep.subr.mxu0 0.0
    %787 = vmatpush1.xpose.msra.mxu0 0.0
    %788 = vmatprep.subr.mxu0 0.0
    %789 = vmatpush1.xpose.msra.mxu0 0.0
    %790 = vmatprep.subr.mxu0 0.0
    %791 = vmatpush1.xpose.msra.mxu0 0.0
    %792 = vmatprep.subr.mxu0 0.0
    %793 = vmatpush1.xpose.msra.mxu0 0.0
    %794 = vmatprep.subr.mxu0 0.0
    %795 = vmatpush1.xpose.msra.mxu0 0.0
    %796 = vmatprep.subr.mxu0 0.0
    %797 = vmatpush1.xpose.msra.mxu0 0.0
    %798 = vmatprep.subr.mxu0 0.0
    %799 = vmatpush1.xpose.msra.mxu0 0.0
    %800 = vmatprep.subr.mxu0 0.0
    %801 = vmatpush1.xpose.msra.mxu0 0.0
    %802 = vmatprep.subr.mxu0 0.0
    %803 = vmatpush1.xpose.msra.mxu0 0.0
    %804 = vmatprep.subr.mxu0 0.0
    %805 = vmatpush1.xpose.msra.mxu0 0.0
    %806 = vmatprep.subr.mxu0 0.0
    %807 = vmatpush1.xpose.msra.mxu0 0.0
    %808 = vmatprep.subr.mxu0 0.0
    %809 = vmatpush1.xpose.msra.mxu0 %v780
    %810 = vmatprep.subr.mxu0 0.0
    %811 = vmatpush1.xpose.msra.mxu0 %v777
    %812 = vmatprep.subr.mxu0 0.0
    %813 = vmatpush1.xpose.msra.mxu0 %v774
    %814 = vmatprep.subr.mxu0 0.0
    %815 = vmatpush2.xpose.msra.mxu0 0.0
    %816 = vmatprep.subr.mxu0 0.0
    %817 = vmatpush2.xpose.msra.mxu0 0.0
    %818 = vmatprep.subr.mxu0 0.0
    %819 = vmatpush2.xpose.msra.mxu0 0.0
    %820 = vmatprep.subr.mxu0 0.0
    %821 = vmatpush2.xpose.msra.mxu0 0.0
    %822 = vmatprep.subr.mxu0 0.0
    %823 = vmatpush2.xpose.msra.mxu0 0.0
    %824 = vmatprep.subr.mxu0 0.0
    %825 = vmatpush2.xpose.msra.mxu0 0.0
    %826 = vmatprep.subr.mxu0 0.0
    %827 = vmatpush2.xpose.msra.mxu0 0.0
    %828 = vmatprep.subr.mxu0 0.0
    %829 = vmatpush2.xpose.msra.mxu0 0.0
    %830 = vmatprep.subr.mxu0 0.0
    %831 = vmatpush2.xpose.msra.mxu0 0.0
    %832 = vmatprep.subr.mxu0 0.0
    %833 = vmatpush2.xpose.msra.mxu0 0.0
    %834 = vmatprep.subr.mxu0 0.0
    %835 = vmatpush2.xpose.msra.mxu0 0.0
    %836 = vmatprep.subr.mxu0 0.0
    %837 = vmatpush2.xpose.msra.mxu0 0.0
    %838 = vmatprep.subr.mxu0 0.0
    %839 = vmatpush2.xpose.msra.mxu0 0.0
    %840 = vmatprep.subr.mxu0 0.0
    %841 = vmatpush2.xpose.msra.mxu0 0.0
    %842 = vmatprep.subr.mxu0 0.0
    %843 = vmatpush2.xpose.msra.mxu0 0.0
    %844 = vmatprep.subr.mxu0 0.0
    %845 = vmatpush2.xpose.msra.mxu0 0.0
    %846 = vmatprep.mubr.f32.mxu0 0.0
    %847 = vmatmul.mubr.f32.gmra.mxu0 %v771
    %v848 = vpop.f32.mrf.mxu0
    %v849 = vadd.f32 0.0, %v848
    %v850 = vpop.f32.mrf.mxu0
    %851 = vdwg.mxu0
    %v852 = vsel %vm366, %v759, 0
    %v855 = vsel %vm366, %v521, 0
    %v858 = vsel %vm366, %v526, 0
    %v861 = vsel %vm366, %v531, 0
    %863 = vmatprep.subr.mxu0 0.0
    %864 = vmatpush1.xpose.msra.mxu0 0.0
    %865 = vmatprep.subr.mxu0 0.0
    %866 = vmatpush1.xpose.msra.mxu0 0.0
    %867 = vmatprep.subr.mxu0 0.0
    %868 = vmatpush1.xpose.msra.mxu0 0.0
    %869 = vmatprep.subr.mxu0 0.0
    %870 = vmatpush1.xpose.msra.mxu0 0.0
    %871 = vmatprep.subr.mxu0 0.0
    %872 = vmatpush1.xpose.msra.mxu0 0.0
    %873 = vmatprep.subr.mxu0 0.0
    %874 = vmatpush1.xpose.msra.mxu0 0.0
    %875 = vmatprep.subr.mxu0 0.0
    %876 = vmatpush1.xpose.msra.mxu0 0.0
    %877 = vmatprep.subr.mxu0 0.0
    %878 = vmatpush1.xpose.msra.mxu0 0.0
    %879 = vmatprep.subr.mxu0 0.0
    %880 = vmatpush1.xpose.msra.mxu0 0.0
    %881 = vmatprep.subr.mxu0 0.0
    %882 = vmatpush1.xpose.msra.mxu0 0.0
    %883 = vmatprep.subr.mxu0 0.0
    %884 = vmatpush1.xpose.msra.mxu0 0.0
    %885 = vmatprep.subr.mxu0 0.0
    %886 = vmatpush1.xpose.msra.mxu0 0.0
    %887 = vmatprep.subr.mxu0 0.0
    %888 = vmatpush1.xpose.msra.mxu0 0.0
    %889 = vmatprep.subr.mxu0 0.0
    %890 = vmatpush1.xpose.msra.mxu0 %v861
    %891 = vmatprep.subr.mxu0 0.0
    %892 = vmatpush1.xpose.msra.mxu0 %v858
    %893 = vmatprep.subr.mxu0 0.0
    %894 = vmatpush1.xpose.msra.mxu0 %v855
    %895 = vmatprep.subr.mxu0 0.0
    %896 = vmatpush2.xpose.msra.mxu0 0.0
    %897 = vmatprep.subr.mxu0 0.0
    %898 = vmatpush2.xpose.msra.mxu0 0.0
    %899 = vmatprep.subr.mxu0 0.0
    %900 = vmatpush2.xpose.msra.mxu0 0.0
    %901 = vmatprep.subr.mxu0 0.0
    %902 = vmatpush2.xpose.msra.mxu0 0.0
    %903 = vmatprep.subr.mxu0 0.0
    %904 = vmatpush2.xpose.msra.mxu0 0.0
    %905 = vmatprep.subr.mxu0 0.0
    %906 = vmatpush2.xpose.msra.mxu0 0.0
    %907 = vmatprep.subr.mxu0 0.0
    %908 = vmatpush2.xpose.msra.mxu0 0.0
    %909 = vmatprep.subr.mxu0 0.0
    %910 = vmatpush2.xpose.msra.mxu0 0.0
    %911 = vmatprep.subr.mxu0 0.0
    %912 = vmatpush2.xpose.msra.mxu0 0.0
    %913 = vmatprep.subr.mxu0 0.0
    %914 = vmatpush2.xpose.msra.mxu0 0.0
    %915 = vmatprep.subr.mxu0 0.0
    %916 = vmatpush2.xpose.msra.mxu0 0.0
    %917 = vmatprep.subr.mxu0 0.0
    %918 = vmatpush2.xpose.msra.mxu0 0.0
    %919 = vmatprep.subr.mxu0 0.0
    %920 = vmatpush2.xpose.msra.mxu0 0.0
    %921 = vmatprep.subr.mxu0 0.0
    %922 = vmatpush2.xpose.msra.mxu0 0.0
    %923 = vmatprep.subr.mxu0 0.0
    %924 = vmatpush2.xpose.msra.mxu0 0.0
    %925 = vmatprep.subr.mxu0 0.0
    %926 = vmatpush2.xpose.msra.mxu0 0.0
    %927 = vmatprep.mubr.f32.mxu0 0.0
    %928 = vmatmul.mubr.f32.gmra.mxu0 %v852
    %v929 = vpop.f32.mrf.mxu0
    %v930 = vadd.f32 0.0, %v929
    %v931 = vpop.f32.mrf.mxu0
    %932 = vdwg.mxu0
    %v933 = vsel %vm366, %v767, 0
    %v936 = vsel %vm366, %v536, 0
    %v939 = vsel %vm366, %v541, 0
    %v942 = vsel %vm366, %v546, 0
    %944 = vmatprep.subr.mxu0 0.0
    %945 = vmatpush1.xpose.msra.mxu0 0.0
    %946 = vmatprep.subr.mxu0 0.0
    %947 = vmatpush1.xpose.msra.mxu0 0.0
    %948 = vmatprep.subr.mxu0 0.0
    %949 = vmatpush1.xpose.msra.mxu0 0.0
    %950 = vmatprep.subr.mxu0 0.0
    %951 = vmatpush1.xpose.msra.mxu0 0.0
    %952 = vmatprep.subr.mxu0 0.0
    %953 = vmatpush1.xpose.msra.mxu0 0.0
    %954 = vmatprep.subr.mxu0 0.0
    %955 = vmatpush1.xpose.msra.mxu0 0.0
    %956 = vmatprep.subr.mxu0 0.0
    %957 = vmatpush1.xpose.msra.mxu0 0.0
    %958 = vmatprep.subr.mxu0 0.0
    %959 = vmatpush1.xpose.msra.mxu0 0.0
    %960 = vmatprep.subr.mxu0 0.0
    %961 = vmatpush1.xpose.msra.mxu0 0.0
    %962 = vmatprep.subr.mxu0 0.0
    %963 = vmatpush1.xpose.msra.mxu0 0.0
    %964 = vmatprep.subr.mxu0 0.0
    %965 = vmatpush1.xpose.msra.mxu0 0.0
    %966 = vmatprep.subr.mxu0 0.0
    %967 = vmatpush1.xpose.msra.mxu0 0.0
    %968 = vmatprep.subr.mxu0 0.0
    %969 = vmatpush1.xpose.msra.mxu0 0.0
    %970 = vmatprep.subr.mxu0 0.0
    %971 = vmatpush1.xpose.msra.mxu0 %v942
    %972 = vmatprep.subr.mxu0 0.0
    %973 = vmatpush1.xpose.msra.mxu0 %v939
    %974 = vmatprep.subr.mxu0 0.0
    %975 = vmatpush1.xpose.msra.mxu0 %v936
    %976 = vmatprep.subr.mxu0 0.0
    %977 = vmatpush2.xpose.msra.mxu0 0.0
    %978 = vmatprep.subr.mxu0 0.0
    %979 = vmatpush2.xpose.msra.mxu0 0.0
    %980 = vmatprep.subr.mxu0 0.0
    %981 = vmatpush2.xpose.msra.mxu0 0.0
    %982 = vmatprep.subr.mxu0 0.0
    %983 = vmatpush2.xpose.msra.mxu0 0.0
    %984 = vmatprep.subr.mxu0 0.0
    %985 = vmatpush2.xpose.msra.mxu0 0.0
    %986 = vmatprep.subr.mxu0 0.0
    %987 = vmatpush2.xpose.msra.mxu0 0.0
    %988 = vmatprep.subr.mxu0 0.0
    %989 = vmatpush2.xpose.msra.mxu0 0.0
    %990 = vmatprep.subr.mxu0 0.0
    %991 = vmatpush2.xpose.msra.mxu0 0.0
    %992 = vmatprep.subr.mxu0 0.0
    %993 = vmatpush2.xpose.msra.mxu0 0.0
    %994 = vmatprep.subr.mxu0 0.0
    %995 = vmatpush2.xpose.msra.mxu0 0.0
    %996 = vmatprep.subr.mxu0 0.0
    %997 = vmatpush2.xpose.msra.mxu0 0.0
    %998 = vmatprep.subr.mxu0 0.0
    %999 = vmatpush2.xpose.msra.mxu0 0.0
    %1000 = vmatprep.subr.mxu0 0.0
    %1001 = vmatpush2.xpose.msra.mxu0 0.0
    %1002 = vmatprep.subr.mxu0 0.0
    %1003 = vmatpush2.xpose.msra.mxu0 0.0
    %1004 = vmatprep.subr.mxu0 0.0
    %1005 = vmatpush2.xpose.msra.mxu0 0.0
    %1006 = vmatprep.subr.mxu0 0.0
    %1007 = vmatpush2.xpose.msra.mxu0 0.0
    %1008 = vmatprep.mubr.f32.mxu0 0.0
    %1009 = vmatmul.mubr.f32.gmra.mxu0 %v933
    %v1010 = vpop.f32.mrf.mxu0
    %v1011 = vadd.f32 0.0, %v1010
    %v1012 = vpop.f32.mrf.mxu0
    %1013 = vdwg.mxu0
    %v1014 = vsel %vm366, %v769, 0
    %v1017 = vsel %vm366, %v551, 0
    %v1020 = vsel %vm366, %v556, 0
    %v1023 = vsel %vm366, %v561, 0
    %1025 = vmatprep.subr.mxu0 0.0
    %1026 = vmatpush1.xpose.msra.mxu0 0.0
    %1027 = vmatprep.subr.mxu0 0.0
    %1028 = vmatpush1.xpose.msra.mxu0 0.0
    %1029 = vmatprep.subr.mxu0 0.0
    %1030 = vmatpush1.xpose.msra.mxu0 0.0
    %1031 = vmatprep.subr.mxu0 0.0
    %1032 = vmatpush1.xpose.msra.mxu0 0.0
    %1033 = vmatprep.subr.mxu0 0.0
    %1034 = vmatpush1.xpose.msra.mxu0 0.0
    %1035 = vmatprep.subr.mxu0 0.0
    %1036 = vmatpush1.xpose.msra.mxu0 0.0
    %1037 = vmatprep.subr.mxu0 0.0
    %1038 = vmatpush1.xpose.msra.mxu0 0.0
    %1039 = vmatprep.subr.mxu0 0.0
    %1040 = vmatpush1.xpose.msra.mxu0 0.0
    %1041 = vmatprep.subr.mxu0 0.0
    %1042 = vmatpush1.xpose.msra.mxu0 0.0
    %1043 = vmatprep.subr.mxu0 0.0
    %1044 = vmatpush1.xpose.msra.mxu0 0.0
    %1045 = vmatprep.subr.mxu0 0.0
    %1046 = vmatpush1.xpose.msra.mxu0 0.0
    %1047 = vmatprep.subr.mxu0 0.0
    %1048 = vmatpush1.xpose.msra.mxu0 0.0
    %1049 = vmatprep.subr.mxu0 0.0
    %1050 = vmatpush1.xpose.msra.mxu0 0.0
    %1051 = vmatprep.subr.mxu0 0.0
    %1052 = vmatpush1.xpose.msra.mxu0 %v1023
    %1053 = vmatprep.subr.mxu0 0.0
    %1054 = vmatpush1.xpose.msra.mxu0 %v1020
    %1055 = vmatprep.subr.mxu0 0.0
    %1056 = vmatpush1.xpose.msra.mxu0 %v1017
    %1057 = vmatprep.subr.mxu0 0.0
    %1058 = vmatpush2.xpose.msra.mxu0 0.0
    %1059 = vmatprep.subr.mxu0 0.0
    %1060 = vmatpush2.xpose.msra.mxu0 0.0
    %1061 = vmatprep.subr.mxu0 0.0
    %1062 = vmatpush2.xpose.msra.mxu0 0.0
    %1063 = vmatprep.subr.mxu0 0.0
    %1064 = vmatpush2.xpose.msra.mxu0 0.0
    %1065 = vmatprep.subr.mxu0 0.0
    %1066 = vmatpush2.xpose.msra.mxu0 0.0
    %1067 = vmatprep.subr.mxu0 0.0
    %1068 = vmatpush2.xpose.msra.mxu0 0.0
    %1069 = vmatprep.subr.mxu0 0.0
    %1070 = vmatpush2.xpose.msra.mxu0 0.0
    %1071 = vmatprep.subr.mxu0 0.0
    %1072 = vmatpush2.xpose.msra.mxu0 0.0
    %1073 = vmatprep.subr.mxu0 0.0
    %1074 = vmatpush2.xpose.msra.mxu0 0.0
    %1075 = vmatprep.subr.mxu0 0.0
    %1076 = vmatpush2.xpose.msra.mxu0 0.0
    %1077 = vmatprep.subr.mxu0 0.0
    %1078 = vmatpush2.xpose.msra.mxu0 0.0
    %1079 = vmatprep.subr.mxu0 0.0
    %1080 = vmatpush2.xpose.msra.mxu0 0.0
    %1081 = vmatprep.subr.mxu0 0.0
    %1082 = vmatpush2.xpose.msra.mxu0 0.0
    %1083 = vmatprep.subr.mxu0 0.0
    %1084 = vmatpush2.xpose.msra.mxu0 0.0
    %1085 = vmatprep.subr.mxu0 0.0
    %1086 = vmatpush2.xpose.msra.mxu0 0.0
    %1087 = vmatprep.subr.mxu0 0.0
    %1088 = vmatpush2.xpose.msra.mxu0 0.0
    %1089 = vmatprep.mubr.f32.mxu0 0.0
    %1090 = vmatmul.mubr.f32.gmra.mxu0 %v1014
    %v1091 = vpop.f32.mrf.mxu0
    %v1092 = vadd.f32 0.0, %v1091
    %v1093 = vpop.f32.mrf.mxu0
    %1094 = vdwg.mxu0
    %v1095 = vsel %vm366, %v752, 0
    %v1098 = vsel %vm366, %v566, 0
    %v1101 = vsel %vm366, %v571, 0
    %v1104 = vsel %vm366, %v576, 0
    %1106 = vmatprep.subr.mxu0 0.0
    %1107 = vmatpush1.xpose.msra.mxu0 0.0
    %1108 = vmatprep.subr.mxu0 0.0
    %1109 = vmatpush1.xpose.msra.mxu0 0.0
    %1110 = vmatprep.subr.mxu0 0.0
    %1111 = vmatpush1.xpose.msra.mxu0 0.0
    %1112 = vmatprep.subr.mxu0 0.0
    %1113 = vmatpush1.xpose.msra.mxu0 0.0
    %1114 = vmatprep.subr.mxu0 0.0
    %1115 = vmatpush1.xpose.msra.mxu0 0.0
    %1116 = vmatprep.subr.mxu0 0.0
    %1117 = vmatpush1.xpose.msra.mxu0 0.0
    %1118 = vmatprep.subr.mxu0 0.0
    %1119 = vmatpush1.xpose.msra.mxu0 0.0
    %1120 = vmatprep.subr.mxu0 0.0
    %1121 = vmatpush1.xpose.msra.mxu0 0.0
    %1122 = vmatprep.subr.mxu0 0.0
    %1123 = vmatpush1.xpose.msra.mxu0 0.0
    %1124 = vmatprep.subr.mxu0 0.0
    %1125 = vmatpush1.xpose.msra.mxu0 0.0
    %1126 = vmatprep.subr.mxu0 0.0
    %1127 = vmatpush1.xpose.msra.mxu0 0.0
    %1128 = vmatprep.subr.mxu0 0.0
    %1129 = vmatpush1.xpose.msra.mxu0 0.0
    %1130 = vmatprep.subr.mxu0 0.0
    %1131 = vmatpush1.xpose.msra.mxu0 0.0
    %1132 = vmatprep.subr.mxu0 0.0
    %1133 = vmatpush1.xpose.msra.mxu0 %v1104
    %1134 = vmatprep.subr.mxu0 0.0
    %1135 = vmatpush1.xpose.msra.mxu0 %v1101
    %1136 = vmatprep.subr.mxu0 0.0
    %1137 = vmatpush1.xpose.msra.mxu0 %v1098
    %1138 = vmatprep.subr.mxu0 0.0
    %1139 = vmatpush2.xpose.msra.mxu0 0.0
    %1140 = vmatprep.subr.mxu0 0.0
    %1141 = vmatpush2.xpose.msra.mxu0 0.0
    %1142 = vmatprep.subr.mxu0 0.0
    %1143 = vmatpush2.xpose.msra.mxu0 0.0
    %1144 = vmatprep.subr.mxu0 0.0
    %1145 = vmatpush2.xpose.msra.mxu0 0.0
    %1146 = vmatprep.subr.mxu0 0.0
    %1147 = vmatpush2.xpose.msra.mxu0 0.0
    %1148 = vmatprep.subr.mxu0 0.0
    %1149 = vmatpush2.xpose.msra.mxu0 0.0
    %1150 = vmatprep.subr.mxu0 0.0
    %1151 = vmatpush2.xpose.msra.mxu0 0.0
    %1152 = vmatprep.subr.mxu0 0.0
    %1153 = vmatpush2.xpose.msra.mxu0 0.0
    %1154 = vmatprep.subr.mxu0 0.0
    %1155 = vmatpush2.xpose.msra.mxu0 0.0
    %1156 = vmatprep.subr.mxu0 0.0
    %1157 = vmatpush2.xpose.msra.mxu0 0.0
    %1158 = vmatprep.subr.mxu0 0.0
    %1159 = vmatpush2.xpose.msra.mxu0 0.0
    %1160 = vmatprep.subr.mxu0 0.0
    %1161 = vmatpush2.xpose.msra.mxu0 0.0
    %1162 = vmatprep.subr.mxu0 0.0
    %1163 = vmatpush2.xpose.msra.mxu0 0.0
    %1164 = vmatprep.subr.mxu0 0.0
    %1165 = vmatpush2.xpose.msra.mxu0 0.0
    %1166 = vmatprep.subr.mxu0 0.0
    %1167 = vmatpush2.xpose.msra.mxu0 0.0
    %1168 = vmatprep.subr.mxu0 0.0
    %1169 = vmatpush2.xpose.msra.mxu0 0.0
    %1170 = vmatprep.mubr.f32.mxu0 0.0
    %1171 = vmatmul.mubr.f32.gmra.mxu0 %v1095
    %v1172 = vpop.f32.mrf.mxu0
    %v1173 = vadd.f32 0.0, %v1172
    %v1174 = vpop.f32.mrf.mxu0
    %1175 = vdwg.mxu0
    %v1176 = vsel %vm366, %v766, 0
    %v1179 = vsel %vm366, %v581, 0
    %v1182 = vsel %vm366, %v586, 0
    %v1185 = vsel %vm366, %v591, 0
    %1187 = vmatprep.subr.mxu0 0.0
    %1188 = vmatpush1.xpose.msra.mxu0 0.0
    %1189 = vmatprep.subr.mxu0 0.0
    %1190 = vmatpush1.xpose.msra.mxu0 0.0
    %1191 = vmatprep.subr.mxu0 0.0
    %1192 = vmatpush1.xpose.msra.mxu0 0.0
    %1193 = vmatprep.subr.mxu0 0.0
    %1194 = vmatpush1.xpose.msra.mxu0 0.0
    %1195 = vmatprep.subr.mxu0 0.0
    %1196 = vmatpush1.xpose.msra.mxu0 0.0
    %1197 = vmatprep.subr.mxu0 0.0
    %1198 = vmatpush1.xpose.msra.mxu0 0.0
    %1199 = vmatprep.subr.mxu0 0.0
    %1200 = vmatpush1.xpose.msra.mxu0 0.0
    %1201 = vmatprep.subr.mxu0 0.0
    %1202 = vmatpush1.xpose.msra.mxu0 0.0
    %1203 = vmatprep.subr.mxu0 0.0
    %1204 = vmatpush1.xpose.msra.mxu0 0.0
    %1205 = vmatprep.subr.mxu0 0.0
    %1206 = vmatpush1.xpose.msra.mxu0 0.0
    %1207 = vmatprep.subr.mxu0 0.0
    %1208 = vmatpush1.xpose.msra.mxu0 0.0
    %1209 = vmatprep.subr.mxu0 0.0
    %1210 = vmatpush1.xpose.msra.mxu0 0.0
    %1211 = vmatprep.subr.mxu0 0.0
    %1212 = vmatpush1.xpose.msra.mxu0 0.0
    %1213 = vmatprep.subr.mxu0 0.0
    %1214 = vmatpush1.xpose.msra.mxu0 %v1185
    %1215 = vmatprep.subr.mxu0 0.0
    %1216 = vmatpush1.xpose.msra.mxu0 %v1182
    %1217 = vmatprep.subr.mxu0 0.0
    %1218 = vmatpush1.xpose.msra.mxu0 %v1179
    %1219 = vmatprep.subr.mxu0 0.0
    %1220 = vmatpush2.xpose.msra.mxu0 0.0
    %1221 = vmatprep.subr.mxu0 0.0
    %1222 = vmatpush2.xpose.msra.mxu0 0.0
    %1223 = vmatprep.subr.mxu0 0.0
    %1224 = vmatpush2.xpose.msra.mxu0 0.0
    %1225 = vmatprep.subr.mxu0 0.0
    %1226 = vmatpush2.xpose.msra.mxu0 0.0
    %1227 = vmatprep.subr.mxu0 0.0
    %1228 = vmatpush2.xpose.msra.mxu0 0.0
    %1229 = vmatprep.subr.mxu0 0.0
    %1230 = vmatpush2.xpose.msra.mxu0 0.0
    %1231 = vmatprep.subr.mxu0 0.0
    %1232 = vmatpush2.xpose.msra.mxu0 0.0
    %1233 = vmatprep.subr.mxu0 0.0
    %1234 = vmatpush2.xpose.msra.mxu0 0.0
    %1235 = vmatprep.subr.mxu0 0.0
    %1236 = vmatpush2.xpose.msra.mxu0 0.0
    %1237 = vmatprep.subr.mxu0 0.0
    %1238 = vmatpush2.xpose.msra.mxu0 0.0
    %1239 = vmatprep.subr.mxu0 0.0
    %1240 = vmatpush2.xpose.msra.mxu0 0.0
    %1241 = vmatprep.subr.mxu0 0.0
    %1242 = vmatpush2.xpose.msra.mxu0 0.0
    %1243 = vmatprep.subr.mxu0 0.0
    %1244 = vmatpush2.xpose.msra.mxu0 0.0
    %1245 = vmatprep.subr.mxu0 0.0
    %1246 = vmatpush2.xpose.msra.mxu0 0.0
    %1247 = vmatprep.subr.mxu0 0.0
    %1248 = vmatpush2.xpose.msra.mxu0 0.0
    %1249 = vmatprep.subr.mxu0 0.0
    %1250 = vmatpush2.xpose.msra.mxu0 0.0
    %1251 = vmatprep.mubr.f32.mxu0 0.0
    %1252 = vmatmul.mubr.f32.gmra.mxu0 %v1176
    %v1253 = vpop.f32.mrf.mxu0
    %v1254 = vadd.f32 0.0, %v1253
    %v1255 = vpop.f32.mrf.mxu0
    %1256 = vdwg.mxu0
    %v1257 = vsel %vm366, %v768, 0
    %v1260 = vsel %vm366, %v596, 0
    %v1263 = vsel %vm366, %v601, 0
    %v1266 = vsel %vm366, %v606, 0
    %1268 = vmatprep.subr.mxu0 0.0
    %1269 = vmatpush1.xpose.msra.mxu0 0.0
    %1270 = vmatprep.subr.mxu0 0.0
    %1271 = vmatpush1.xpose.msra.mxu0 0.0
    %1272 = vmatprep.subr.mxu0 0.0
    %1273 = vmatpush1.xpose.msra.mxu0 0.0
    %1274 = vmatprep.subr.mxu0 0.0
    %1275 = vmatpush1.xpose.msra.mxu0 0.0
    %1276 = vmatprep.subr.mxu0 0.0
    %1277 = vmatpush1.xpose.msra.mxu0 0.0
    %1278 = vmatprep.subr.mxu0 0.0
    %1279 = vmatpush1.xpose.msra.mxu0 0.0
    %1280 = vmatprep.subr.mxu0 0.0
    %1281 = vmatpush1.xpose.msra.mxu0 0.0
    %1282 = vmatprep.subr.mxu0 0.0
    %1283 = vmatpush1.xpose.msra.mxu0 0.0
    %1284 = vmatprep.subr.mxu0 0.0
    %1285 = vmatpush1.xpose.msra.mxu0 0.0
    %1286 = vmatprep.subr.mxu0 0.0
    %1287 = vmatpush1.xpose.msra.mxu0 0.0
    %1288 = vmatprep.subr.mxu0 0.0
    %1289 = vmatpush1.xpose.msra.mxu0 0.0
    %1290 = vmatprep.subr.mxu0 0.0
    %1291 = vmatpush1.xpose.msra.mxu0 0.0
    %1292 = vmatprep.subr.mxu0 0.0
    %1293 = vmatpush1.xpose.msra.mxu0 0.0
    %1294 = vmatprep.subr.mxu0 0.0
    %1295 = vmatpush1.xpose.msra.mxu0 %v1266
    %1296 = vmatprep.subr.mxu0 0.0
    %1297 = vmatpush1.xpose.msra.mxu0 %v1263
    %1298 = vmatprep.subr.mxu0 0.0
    %1299 = vmatpush1.xpose.msra.mxu0 %v1260
    %1300 = vmatprep.subr.mxu0 0.0
    %1301 = vmatpush2.xpose.msra.mxu0 0.0
    %1302 = vmatprep.subr.mxu0 0.0
    %1303 = vmatpush2.xpose.msra.mxu0 0.0
    %1304 = vmatprep.subr.mxu0 0.0
    %1305 = vmatpush2.xpose.msra.mxu0 0.0
    %1306 = vmatprep.subr.mxu0 0.0
    %1307 = vmatpush2.xpose.msra.mxu0 0.0
    %1308 = vmatprep.subr.mxu0 0.0
    %1309 = vmatpush2.xpose.msra.mxu0 0.0
    %1310 = vmatprep.subr.mxu0 0.0
    %1311 = vmatpush2.xpose.msra.mxu0 0.0
    %1312 = vmatprep.subr.mxu0 0.0
    %1313 = vmatpush2.xpose.msra.mxu0 0.0
    %1314 = vmatprep.subr.mxu0 0.0
    %1315 = vmatpush2.xpose.msra.mxu0 0.0
    %1316 = vmatprep.subr.mxu0 0.0
    %1317 = vmatpush2.xpose.msra.mxu0 0.0
    %1318 = vmatprep.subr.mxu0 0.0
    %1319 = vmatpush2.xpose.msra.mxu0 0.0
    %1320 = vmatprep.subr.mxu0 0.0
    %1321 = vmatpush2.xpose.msra.mxu0 0.0
    %1322 = vmatprep.subr.mxu0 0.0
    %1323 = vmatpush2.xpose.msra.mxu0 0.0
    %1324 = vmatprep.subr.mxu0 0.0
    %1325 = vmatpush2.xpose.msra.mxu0 0.0
    %1326 = vmatprep.subr.mxu0 0.0
    %1327 = vmatpush2.xpose.msra.mxu0 0.0
    %1328 = vmatprep.subr.mxu0 0.0
    %1329 = vmatpush2.xpose.msra.mxu0 0.0
    %1330 = vmatprep.subr.mxu0 0.0
    %1331 = vmatpush2.xpose.msra.mxu0 0.0
    %1332 = vmatprep.mubr.f32.mxu0 0.0
    %1333 = vmatmul.mubr.f32.gmra.mxu0 %v1257
    %v1334 = vpop.f32.mrf.mxu0
    %v1335 = vadd.f32 0.0, %v1334
    %v1336 = vpop.f32.mrf.mxu0
    %1337 = vdwg.mxu0
    %v1338 = vsel %vm366, %v770, 0
    %v1341 = vsel %vm366, %v611, 0
    %v1344 = vsel %vm366, %v616, 0
    %v1347 = vsel %vm366, %v621, 0
    %1349 = vmatprep.subr.mxu0 0.0
    %1350 = vmatpush1.xpose.msra.mxu0 0.0
    %1351 = vmatprep.subr.mxu0 0.0
    %1352 = vmatpush1.xpose.msra.mxu0 0.0
    %1353 = vmatprep.subr.mxu0 0.0
    %1354 = vmatpush1.xpose.msra.mxu0 0.0
    %1355 = vmatprep.subr.mxu0 0.0
    %1356 = vmatpush1.xpose.msra.mxu0 0.0
    %1357 = vmatprep.subr.mxu0 0.0
    %1358 = vmatpush1.xpose.msra.mxu0 0.0
    %1359 = vmatprep.subr.mxu0 0.0
    %1360 = vmatpush1.xpose.msra.mxu0 0.0
    %1361 = vmatprep.subr.mxu0 0.0
    %1362 = vmatpush1.xpose.msra.mxu0 0.0
    %1363 = vmatprep.subr.mxu0 0.0
    %1364 = vmatpush1.xpose.msra.mxu0 0.0
    %1365 = vmatprep.subr.mxu0 0.0
    %1366 = vmatpush1.xpose.msra.mxu0 0.0
    %1367 = vmatprep.subr.mxu0 0.0
    %1368 = vmatpush1.xpose.msra.mxu0 0.0
    %1369 = vmatprep.subr.mxu0 0.0
    %1370 = vmatpush1.xpose.msra.mxu0 0.0
    %1371 = vmatprep.subr.mxu0 0.0
    %1372 = vmatpush1.xpose.msra.mxu0 0.0
    %1373 = vmatprep.subr.mxu0 0.0
    %1374 = vmatpush1.xpose.msra.mxu0 0.0
    %1375 = vmatprep.subr.mxu0 0.0
    %1376 = vmatpush1.xpose.msra.mxu0 %v1347
    %1377 = vmatprep.subr.mxu0 0.0
    %1378 = vmatpush1.xpose.msra.mxu0 %v1344
    %1379 = vmatprep.subr.mxu0 0.0
    %1380 = vmatpush1.xpose.msra.mxu0 %v1341
    %1381 = vmatprep.subr.mxu0 0.0
    %1382 = vmatpush2.xpose.msra.mxu0 0.0
    %1383 = vmatprep.subr.mxu0 0.0
    %1384 = vmatpush2.xpose.msra.mxu0 0.0
    %1385 = vmatprep.subr.mxu0 0.0
    %1386 = vmatpush2.xpose.msra.mxu0 0.0
    %1387 = vmatprep.subr.mxu0 0.0
    %1388 = vmatpush2.xpose.msra.mxu0 0.0
    %1389 = vmatprep.subr.mxu0 0.0
    %1390 = vmatpush2.xpose.msra.mxu0 0.0
    %1391 = vmatprep.subr.mxu0 0.0
    %1392 = vmatpush2.xpose.msra.mxu0 0.0
    %1393 = vmatprep.subr.mxu0 0.0
    %1394 = vmatpush2.xpose.msra.mxu0 0.0
    %1395 = vmatprep.subr.mxu0 0.0
    %1396 = vmatpush2.xpose.msra.mxu0 0.0
    %1397 = vmatprep.subr.mxu0 0.0
    %1398 = vmatpush2.xpose.msra.mxu0 0.0
    %1399 = vmatprep.subr.mxu0 0.0
    %1400 = vmatpush2.xpose.msra.mxu0 0.0
    %1401 = vmatprep.subr.mxu0 0.0
    %1402 = vmatpush2.xpose.msra.mxu0 0.0
    %1403 = vmatprep.subr.mxu0 0.0
    %1404 = vmatpush2.xpose.msra.mxu0 0.0
    %1405 = vmatprep.subr.mxu0 0.0
    %1406 = vmatpush2.xpose.msra.mxu0 0.0
    %1407 = vmatprep.subr.mxu0 0.0
    %1408 = vmatpush2.xpose.msra.mxu0 0.0
    %1409 = vmatprep.subr.mxu0 0.0
    %1410 = vmatpush2.xpose.msra.mxu0 0.0
    %1411 = vmatprep.subr.mxu0 0.0
    %1412 = vmatpush2.xpose.msra.mxu0 0.0
    %1413 = vmatprep.mubr.f32.mxu0 0.0
    %1414 = vmatmul.mubr.f32.gmra.mxu0 %v1338
    %v1415 = vpop.f32.mrf.mxu0
    %v1416 = vadd.f32 0.0, %v1415
    %v1417 = vpop.f32.mrf.mxu0
    %1418 = vdwg.mxu0
    %v1419 = vmul.f32 %v849, 0.17677669
    %v1420 = vmul.f32 %v930, 0.17677669
    %v1421 = vmul.f32 %v1011, 0.17677669
    %v1422 = vmul.f32 %v1092, 0.17677669
    %v1423 = vmul.f32 %v1173, 0.17677669
    %v1424 = vmul.f32 %v1254, 0.17677669
    %v1425 = vmul.f32 %v1335, 0.17677669
    %v1426 = vmul.f32 %v1416, 0.17677669
    %v1427 = vlaneseq
    %v1428 = vand.u32 %v1427, 127
    %vm1429 = vcmp.lt.s32.totalorder %v1428, 19
    %v1430 = vsel %vm1429, %v1419, -1e+30
    %v1431 = vsel %vm1429, %v1420, -1e+30
    %v1432 = vsel %vm1429, %v1421, -1e+30
    %v1433 = vsel %vm1429, %v1422, -1e+30
    %v1434 = vsel %vm1429, %v1423, -1e+30
    %v1435 = vsel %vm1429, %v1424, -1e+30
    %v1436 = vsel %vm1429, %v1425, -1e+30
    %v1437 = vsel %vm1429, %v1426, -1e+30
    %vm1438 = vcmask 188416
    %v1439 = vsel %vm1438, %v1430, -inf
    %1440 = vmax.xlane.f32.xlu0 %v1439
    %v1441 = vpop.xlane.xlu0 %1440
    %v1442 = vsel %vm1438, %v1431, -inf
    %1443 = vmax.xlane.f32.xlu0 %v1442
    %v1444 = vpop.xlane.xlu0 %1443
    %v1445 = vsel %vm1438, %v1432, -inf
    %1446 = vmax.xlane.f32.xlu0 %v1445
    %v1447 = vpop.xlane.xlu0 %1446
    %v1448 = vsel %vm1438, %v1433, -inf
    %1449 = vmax.xlane.f32.xlu0 %v1448
    %v1450 = vpop.xlane.xlu0 %1449
    %v1451 = vsel %vm1438, %v1434, -inf
    %1452 = vmax.xlane.f32.xlu0 %v1451
    %v1453 = vpop.xlane.xlu0 %1452
    %v1454 = vsel %vm1438, %v1435, -inf
    %1455 = vmax.xlane.f32.xlu0 %v1454
    %v1456 = vpop.xlane.xlu0 %1455
    %v1457 = vsel %vm1438, %v1436, -inf
    %1458 = vmax.xlane.f32.xlu0 %v1457
    %v1459 = vpop.xlane.xlu0 %1458
    %v1460 = vsel %vm1438, %v1437, -inf
    %1461 = vmax.xlane.f32.xlu0 %v1460
    %v1462 = vpop.xlane.xlu0 %1461
    %v1463 = vsub.f32 %v1430, %v1441
    %v1464 = vsub.f32 %v1431, %v1444
    %v1465 = vsub.f32 %v1432, %v1447
    %v1466 = vsub.f32 %v1433, %v1450
    %v1467 = vsub.f32 %v1434, %v1453
    %v1468 = vsub.f32 %v1435, %v1456
    %v1469 = vsub.f32 %v1436, %v1459
    %v1470 = vsub.f32 %v1437, %v1462
    %v1471 = vmul.f32 %v1463, 1.442695
    %v1472 = vpow.pop %v1471
    %v1473 = vmul.f32 %v1464, 1.442695
    %v1474 = vpow.pop %v1473
    %v1475 = vmul.f32 %v1465, 1.442695
    %v1476 = vpow.pop %v1475
    %v1477 = vmul.f32 %v1466, 1.442695
    %v1478 = vpow.pop %v1477
    %v1479 = vmul.f32 %v1467, 1.442695
    %v1480 = vpow.pop %v1479
    %v1481 = vmul.f32 %v1468, 1.442695
    %v1482 = vpow.pop %v1481
    %v1483 = vmul.f32 %v1469, 1.442695
    %v1484 = vpow.pop %v1483
    %v1485 = vmul.f32 %v1470, 1.442695
    %v1486 = vpow.pop %v1485
    %v1487 = vsel %vm1438, %v1472, 0.0
    %1488 = vadd.xlane.f32.xlu0 %v1487
    %v1489 = vpop.xlane.xlu0 %1488
    %v1490 = vsel %vm1438, %v1474, 0.0
    %1491 = vadd.xlane.f32.xlu0 %v1490
    %v1492 = vpop.xlane.xlu0 %1491
    %v1493 = vsel %vm1438, %v1476, 0.0
    %1494 = vadd.xlane.f32.xlu0 %v1493
    %v1495 = vpop.xlane.xlu0 %1494
    %v1496 = vsel %vm1438, %v1478, 0.0
    %1497 = vadd.xlane.f32.xlu0 %v1496
    %v1498 = vpop.xlane.xlu0 %1497
    %v1499 = vsel %vm1438, %v1480, 0.0
    %1500 = vadd.xlane.f32.xlu0 %v1499
    %v1501 = vpop.xlane.xlu0 %1500
    %v1502 = vsel %vm1438, %v1482, 0.0
    %1503 = vadd.xlane.f32.xlu0 %v1502
    %v1504 = vpop.xlane.xlu0 %1503
    %v1505 = vsel %vm1438, %v1484, 0.0
    %1506 = vadd.xlane.f32.xlu0 %v1505
    %v1507 = vpop.xlane.xlu0 %1506
    %v1508 = vsel %vm1438, %v1486, 0.0
    %1509 = vadd.xlane.f32.xlu0 %v1508
    %v1510 = vpop.xlane.xlu0 %1509
    %v1511 = vrcp.pop %v1489
    %v1512 = vmul.f32 %v1472, %v1511
    %v1513 = vrcp.pop %v1492
    %v1514 = vmul.f32 %v1474, %v1513
    %v1515 = vrcp.pop %v1495
    %v1516 = vmul.f32 %v1476, %v1515
    %v1517 = vrcp.pop %v1498
    %v1518 = vmul.f32 %v1478, %v1517
    %v1519 = vrcp.pop %v1501
    %v1520 = vmul.f32 %v1480, %v1519
    %v1521 = vrcp.pop %v1504
    %v1522 = vmul.f32 %v1482, %v1521
    %v1523 = vrcp.pop %v1507
    %v1524 = vmul.f32 %v1484, %v1523
    %v1525 = vrcp.pop %v1510
    %v1526 = vmul.f32 %v1486, %v1525
    %1527 = vrot.lane.b32.xlu0 %v506, 96
    %v1528 = vpop.permute.xlu0 %1527
    %1529 = vrot.lane.b32.xlu0 %v511, 96
    %v1530 = vpop.permute.xlu0 %1529
    %1531 = vrot.lane.b32.xlu0 %v516, 96
    %v1532 = vpop.permute.xlu0 %1531
    %vm1536 = vcmask 195584
    %v1538 = vsel %vm1536, %v1512, 0
    %1540 = vmatprep.subr.mxu0 0.0
    %1541 = vmatpush1.msra.mxu0 0.0
    %1542 = vmatprep.subr.mxu0 0.0
    %1543 = vmatpush1.msra.mxu0 0.0
    %1544 = vmatprep.subr.mxu0 0.0
    %1545 = vmatpush1.msra.mxu0 0.0
    %1546 = vmatprep.subr.mxu0 0.0
    %1547 = vmatpush1.msra.mxu0 0.0
    %1548 = vmatprep.subr.mxu0 0.0
    %1549 = vmatpush1.msra.mxu0 0.0
    %1550 = vmatprep.subr.mxu0 0.0
    %1551 = vmatpush1.msra.mxu0 0.0
    %1552 = vmatprep.subr.mxu0 0.0
    %1553 = vmatpush1.msra.mxu0 0.0
    %1554 = vmatprep.subr.mxu0 0.0
    %1555 = vmatpush1.msra.mxu0 0.0
    %1556 = vmatprep.subr.mxu0 0.0
    %1557 = vmatpush1.msra.mxu0 0.0
    %1558 = vmatprep.subr.mxu0 0.0
    %1559 = vmatpush1.msra.mxu0 0.0
    %1560 = vmatprep.subr.mxu0 0.0
    %1561 = vmatpush1.msra.mxu0 0.0
    %1562 = vmatprep.subr.mxu0 0.0
    %1563 = vmatpush1.msra.mxu0 0.0
    %1564 = vmatprep.subr.mxu0 0.0
    %1565 = vmatpush1.msra.mxu0 0.0
    %1566 = vmatprep.subr.mxu0 0.0
    %1567 = vmatpush1.msra.mxu0 %v1532
    %1568 = vmatprep.subr.mxu0 0.0
    %1569 = vmatpush1.msra.mxu0 %v1530
    %1570 = vmatprep.subr.mxu0 0.0
    %1571 = vmatpush1.msra.mxu0 %v1528
    %1572 = vmatprep.subr.mxu0 0.0
    %1573 = vmatpush2.msra.mxu0 0.0
    %1574 = vmatprep.subr.mxu0 0.0
    %1575 = vmatpush2.msra.mxu0 0.0
    %1576 = vmatprep.subr.mxu0 0.0
    %1577 = vmatpush2.msra.mxu0 0.0
    %1578 = vmatprep.subr.mxu0 0.0
    %1579 = vmatpush2.msra.mxu0 0.0
    %1580 = vmatprep.subr.mxu0 0.0
    %1581 = vmatpush2.msra.mxu0 0.0
    %1582 = vmatprep.subr.mxu0 0.0
    %1583 = vmatpush2.msra.mxu0 0.0
    %1584 = vmatprep.subr.mxu0 0.0
    %1585 = vmatpush2.msra.mxu0 0.0
    %1586 = vmatprep.subr.mxu0 0.0
    %1587 = vmatpush2.msra.mxu0 0.0
    %1588 = vmatprep.subr.mxu0 0.0
    %1589 = vmatpush2.msra.mxu0 0.0
    %1590 = vmatprep.subr.mxu0 0.0
    %1591 = vmatpush2.msra.mxu0 0.0
    %1592 = vmatprep.subr.mxu0 0.0
    %1593 = vmatpush2.msra.mxu0 0.0
    %1594 = vmatprep.subr.mxu0 0.0
    %1595 = vmatpush2.msra.mxu0 0.0
    %1596 = vmatprep.subr.mxu0 0.0
    %1597 = vmatpush2.msra.mxu0 0.0
    %1598 = vmatprep.subr.mxu0 0.0
    %1599 = vmatpush2.msra.mxu0 0.0
    %1600 = vmatprep.subr.mxu0 0.0
    %1601 = vmatpush2.msra.mxu0 0.0
    %1602 = vmatprep.subr.mxu0 0.0
    %1603 = vmatpush2.msra.mxu0 0.0
    %1604 = vmatprep.mubr.f32.mxu0 0.0
    %1605 = vmatmul.mubr.f32.gmra.mxu0 %v1538
    %v1606 = vpop.f32.mrf.mxu0
    %v1607 = vadd.f32 0.0, %v1606
    %v1608 = vpop.f32.mrf.mxu0
    %1609 = vdwg.mxu0
    %1610 = vrot.lane.b32.xlu0 %v521, 96
    %v1611 = vpop.permute.xlu0 %1610
    %1612 = vrot.lane.b32.xlu0 %v526, 96
    %v1613 = vpop.permute.xlu0 %1612
    %1614 = vrot.lane.b32.xlu0 %v531, 96
    %v1615 = vpop.permute.xlu0 %1614
    %v1620 = vsel %vm1536, %v1514, 0
    %1622 = vmatprep.subr.mxu0 0.0
    %1623 = vmatpush1.msra.mxu0 0.0
    %1624 = vmatprep.subr.mxu0 0.0
    %1625 = vmatpush1.msra.mxu0 0.0
    %1626 = vmatprep.subr.mxu0 0.0
    %1627 = vmatpush1.msra.mxu0 0.0
    %1628 = vmatprep.subr.mxu0 0.0
    %1629 = vmatpush1.msra.mxu0 0.0
    %1630 = vmatprep.subr.mxu0 0.0
    %1631 = vmatpush1.msra.mxu0 0.0
    %1632 = vmatprep.subr.mxu0 0.0
    %1633 = vmatpush1.msra.mxu0 0.0
    %1634 = vmatprep.subr.mxu0 0.0
    %1635 = vmatpush1.msra.mxu0 0.0
    %1636 = vmatprep.subr.mxu0 0.0
    %1637 = vmatpush1.msra.mxu0 0.0
    %1638 = vmatprep.subr.mxu0 0.0
    %1639 = vmatpush1.msra.mxu0 0.0
    %1640 = vmatprep.subr.mxu0 0.0
    %1641 = vmatpush1.msra.mxu0 0.0
    %1642 = vmatprep.subr.mxu0 0.0
    %1643 = vmatpush1.msra.mxu0 0.0
    %1644 = vmatprep.subr.mxu0 0.0
    %1645 = vmatpush1.msra.mxu0 0.0
    %1646 = vmatprep.subr.mxu0 0.0
    %1647 = vmatpush1.msra.mxu0 0.0
    %1648 = vmatprep.subr.mxu0 0.0
    %1649 = vmatpush1.msra.mxu0 %v1615
    %1650 = vmatprep.subr.mxu0 0.0
    %1651 = vmatpush1.msra.mxu0 %v1613
    %1652 = vmatprep.subr.mxu0 0.0
    %1653 = vmatpush1.msra.mxu0 %v1611
    %1654 = vmatprep.subr.mxu0 0.0
    %1655 = vmatpush2.msra.mxu0 0.0
    %1656 = vmatprep.subr.mxu0 0.0
    %1657 = vmatpush2.msra.mxu0 0.0
    %1658 = vmatprep.subr.mxu0 0.0
    %1659 = vmatpush2.msra.mxu0 0.0
    %1660 = vmatprep.subr.mxu0 0.0
    %1661 = vmatpush2.msra.mxu0 0.0
    %1662 = vmatprep.subr.mxu0 0.0
    %1663 = vmatpush2.msra.mxu0 0.0
    %1664 = vmatprep.subr.mxu0 0.0
    %1665 = vmatpush2.msra.mxu0 0.0
    %1666 = vmatprep.subr.mxu0 0.0
    %1667 = vmatpush2.msra.mxu0 0.0
    %1668 = vmatprep.subr.mxu0 0.0
    %1669 = vmatpush2.msra.mxu0 0.0
    %1670 = vmatprep.subr.mxu0 0.0
    %1671 = vmatpush2.msra.mxu0 0.0
    %1672 = vmatprep.subr.mxu0 0.0
    %1673 = vmatpush2.msra.mxu0 0.0
    %1674 = vmatprep.subr.mxu0 0.0
    %1675 = vmatpush2.msra.mxu0 0.0
    %1676 = vmatprep.subr.mxu0 0.0
    %1677 = vmatpush2.msra.mxu0 0.0
    %1678 = vmatprep.subr.mxu0 0.0
    %1679 = vmatpush2.msra.mxu0 0.0
    %1680 = vmatprep.subr.mxu0 0.0
    %1681 = vmatpush2.msra.mxu0 0.0
    %1682 = vmatprep.subr.mxu0 0.0
    %1683 = vmatpush2.msra.mxu0 0.0
    %1684 = vmatprep.subr.mxu0 0.0
    %1685 = vmatpush2.msra.mxu0 0.0
    %1686 = vmatprep.mubr.f32.mxu0 0.0
    %1687 = vmatmul.mubr.f32.gmra.mxu0 %v1620
    %v1688 = vpop.f32.mrf.mxu0
    %v1689 = vadd.f32 0.0, %v1688
    %v1690 = vpop.f32.mrf.mxu0
    %1691 = vdwg.mxu0
    %1692 = vrot.lane.b32.xlu0 %v536, 96
    %v1693 = vpop.permute.xlu0 %1692
    %1694 = vrot.lane.b32.xlu0 %v541, 96
    %v1695 = vpop.permute.xlu0 %1694
    %1696 = vrot.lane.b32.xlu0 %v546, 96
    %v1697 = vpop.permute.xlu0 %1696
    %v1702 = vsel %vm1536, %v1516, 0
    %1704 = vmatprep.subr.mxu0 0.0
    %1705 = vmatpush1.msra.mxu0 0.0
    %1706 = vmatprep.subr.mxu0 0.0
    %1707 = vmatpush1.msra.mxu0 0.0
    %1708 = vmatprep.subr.mxu0 0.0
    %1709 = vmatpush1.msra.mxu0 0.0
    %1710 = vmatprep.subr.mxu0 0.0
    %1711 = vmatpush1.msra.mxu0 0.0
    %1712 = vmatprep.subr.mxu0 0.0
    %1713 = vmatpush1.msra.mxu0 0.0
    %1714 = vmatprep.subr.mxu0 0.0
    %1715 = vmatpush1.msra.mxu0 0.0
    %1716 = vmatprep.subr.mxu0 0.0
    %1717 = vmatpush1.msra.mxu0 0.0
    %1718 = vmatprep.subr.mxu0 0.0
    %1719 = vmatpush1.msra.mxu0 0.0
    %1720 = vmatprep.subr.mxu0 0.0
    %1721 = vmatpush1.msra.mxu0 0.0
    %1722 = vmatprep.subr.mxu0 0.0
    %1723 = vmatpush1.msra.mxu0 0.0
    %1724 = vmatprep.subr.mxu0 0.0
    %1725 = vmatpush1.msra.mxu0 0.0
    %1726 = vmatprep.subr.mxu0 0.0
    %1727 = vmatpush1.msra.mxu0 0.0
    %1728 = vmatprep.subr.mxu0 0.0
    %1729 = vmatpush1.msra.mxu0 0.0
    %1730 = vmatprep.subr.mxu0 0.0
    %1731 = vmatpush1.msra.mxu0 %v1697
    %1732 = vmatprep.subr.mxu0 0.0
    %1733 = vmatpush1.msra.mxu0 %v1695
    %1734 = vmatprep.subr.mxu0 0.0
    %1735 = vmatpush1.msra.mxu0 %v1693
    %1736 = vmatprep.subr.mxu0 0.0
    %1737 = vmatpush2.msra.mxu0 0.0
    %1738 = vmatprep.subr.mxu0 0.0
    %1739 = vmatpush2.msra.mxu0 0.0
    %1740 = vmatprep.subr.mxu0 0.0
    %1741 = vmatpush2.msra.mxu0 0.0
    %1742 = vmatprep.subr.mxu0 0.0
    %1743 = vmatpush2.msra.mxu0 0.0
    %1744 = vmatprep.subr.mxu0 0.0
    %1745 = vmatpush2.msra.mxu0 0.0
    %1746 = vmatprep.subr.mxu0 0.0
    %1747 = vmatpush2.msra.mxu0 0.0
    %1748 = vmatprep.subr.mxu0 0.0
    %1749 = vmatpush2.msra.mxu0 0.0
    %1750 = vmatprep.subr.mxu0 0.0
    %1751 = vmatpush2.msra.mxu0 0.0
    %1752 = vmatprep.subr.mxu0 0.0
    %1753 = vmatpush2.msra.mxu0 0.0
    %1754 = vmatprep.subr.mxu0 0.0
    %1755 = vmatpush2.msra.mxu0 0.0
    %1756 = vmatprep.subr.mxu0 0.0
    %1757 = vmatpush2.msra.mxu0 0.0
    %1758 = vmatprep.subr.mxu0 0.0
    %1759 = vmatpush2.msra.mxu0 0.0
    %1760 = vmatprep.subr.mxu0 0.0
    %1761 = vmatpush2.msra.mxu0 0.0
    %1762 = vmatprep.subr.mxu0 0.0
    %1763 = vmatpush2.msra.mxu0 0.0
    %1764 = vmatprep.subr.mxu0 0.0
    %1765 = vmatpush2.msra.mxu0 0.0
    %1766 = vmatprep.subr.mxu0 0.0
    %1767 = vmatpush2.msra.mxu0 0.0
    %1768 = vmatprep.mubr.f32.mxu0 0.0
    %1769 = vmatmul.mubr.f32.gmra.mxu0 %v1702
    %v1770 = vpop.f32.mrf.mxu0
    %v1771 = vadd.f32 0.0, %v1770
    %v1772 = vpop.f32.mrf.mxu0
    %1773 = vdwg.mxu0
    %1774 = vrot.lane.b32.xlu0 %v551, 96
    %v1775 = vpop.permute.xlu0 %1774
    %1776 = vrot.lane.b32.xlu0 %v556, 96
    %v1777 = vpop.permute.xlu0 %1776
    %1778 = vrot.lane.b32.xlu0 %v561, 96
    %v1779 = vpop.permute.xlu0 %1778
    %v1784 = vsel %vm1536, %v1518, 0
    %1786 = vmatprep.subr.mxu0 0.0
    %1787 = vmatpush1.msra.mxu0 0.0
    %1788 = vmatprep.subr.mxu0 0.0
    %1789 = vmatpush1.msra.mxu0 0.0
    %1790 = vmatprep.subr.mxu0 0.0
    %1791 = vmatpush1.msra.mxu0 0.0
    %1792 = vmatprep.subr.mxu0 0.0
    %1793 = vmatpush1.msra.mxu0 0.0
    %1794 = vmatprep.subr.mxu0 0.0
    %1795 = vmatpush1.msra.mxu0 0.0
    %1796 = vmatprep.subr.mxu0 0.0
    %1797 = vmatpush1.msra.mxu0 0.0
    %1798 = vmatprep.subr.mxu0 0.0
    %1799 = vmatpush1.msra.mxu0 0.0
    %1800 = vmatprep.subr.mxu0 0.0
    %1801 = vmatpush1.msra.mxu0 0.0
    %1802 = vmatprep.subr.mxu0 0.0
    %1803 = vmatpush1.msra.mxu0 0.0
    %1804 = vmatprep.subr.mxu0 0.0
    %1805 = vmatpush1.msra.mxu0 0.0
    %1806 = vmatprep.subr.mxu0 0.0
    %1807 = vmatpush1.msra.mxu0 0.0
    %1808 = vmatprep.subr.mxu0 0.0
    %1809 = vmatpush1.msra.mxu0 0.0
    %1810 = vmatprep.subr.mxu0 0.0
    %1811 = vmatpush1.msra.mxu0 0.0
    %1812 = vmatprep.subr.mxu0 0.0
    %1813 = vmatpush1.msra.mxu0 %v1779
    %1814 = vmatprep.subr.mxu0 0.0
    %1815 = vmatpush1.msra.mxu0 %v1777
    %1816 = vmatprep.subr.mxu0 0.0
    %1817 = vmatpush1.msra.mxu0 %v1775
    %1818 = vmatprep.subr.mxu0 0.0
    %1819 = vmatpush2.msra.mxu0 0.0
    %1820 = vmatprep.subr.mxu0 0.0
    %1821 = vmatpush2.msra.mxu0 0.0
    %1822 = vmatprep.subr.mxu0 0.0
    %1823 = vmatpush2.msra.mxu0 0.0
    %1824 = vmatprep.subr.mxu0 0.0
    %1825 = vmatpush2.msra.mxu0 0.0
    %1826 = vmatprep.subr.mxu0 0.0
    %1827 = vmatpush2.msra.mxu0 0.0
    %1828 = vmatprep.subr.mxu0 0.0
    %1829 = vmatpush2.msra.mxu0 0.0
    %1830 = vmatprep.subr.mxu0 0.0
    %1831 = vmatpush2.msra.mxu0 0.0
    %1832 = vmatprep.subr.mxu0 0.0
    %1833 = vmatpush2.msra.mxu0 0.0
    %1834 = vmatprep.subr.mxu0 0.0
    %1835 = vmatpush2.msra.mxu0 0.0
    %1836 = vmatprep.subr.mxu0 0.0
    %1837 = vmatpush2.msra.mxu0 0.0
    %1838 = vmatprep.subr.mxu0 0.0
    %1839 = vmatpush2.msra.mxu0 0.0
    %1840 = vmatprep.subr.mxu0 0.0
    %1841 = vmatpush2.msra.mxu0 0.0
    %1842 = vmatprep.subr.mxu0 0.0
    %1843 = vmatpush2.msra.mxu0 0.0
    %1844 = vmatprep.subr.mxu0 0.0
    %1845 = vmatpush2.msra.mxu0 0.0
    %1846 = vmatprep.subr.mxu0 0.0
    %1847 = vmatpush2.msra.mxu0 0.0
    %1848 = vmatprep.subr.mxu0 0.0
    %1849 = vmatpush2.msra.mxu0 0.0
    %1850 = vmatprep.mubr.f32.mxu0 0.0
    %1851 = vmatmul.mubr.f32.gmra.mxu0 %v1784
    %v1852 = vpop.f32.mrf.mxu0
    %v1853 = vadd.f32 0.0, %v1852
    %v1854 = vpop.f32.mrf.mxu0
    %1855 = vdwg.mxu0
    %1856 = vrot.lane.b32.xlu0 %v566, 96
    %v1857 = vpop.permute.xlu0 %1856
    %1858 = vrot.lane.b32.xlu0 %v571, 96
    %v1859 = vpop.permute.xlu0 %1858
    %1860 = vrot.lane.b32.xlu0 %v576, 96
    %v1861 = vpop.permute.xlu0 %1860
    %v1866 = vsel %vm1536, %v1520, 0
    %1868 = vmatprep.subr.mxu0 0.0
    %1869 = vmatpush1.msra.mxu0 0.0
    %1870 = vmatprep.subr.mxu0 0.0
    %1871 = vmatpush1.msra.mxu0 0.0
    %1872 = vmatprep.subr.mxu0 0.0
    %1873 = vmatpush1.msra.mxu0 0.0
    %1874 = vmatprep.subr.mxu0 0.0
    %1875 = vmatpush1.msra.mxu0 0.0
    %1876 = vmatprep.subr.mxu0 0.0
    %1877 = vmatpush1.msra.mxu0 0.0
    %1878 = vmatprep.subr.mxu0 0.0
    %1879 = vmatpush1.msra.mxu0 0.0
    %1880 = vmatprep.subr.mxu0 0.0
    %1881 = vmatpush1.msra.mxu0 0.0
    %1882 = vmatprep.subr.mxu0 0.0
    %1883 = vmatpush1.msra.mxu0 0.0
    %1884 = vmatprep.subr.mxu0 0.0
    %1885 = vmatpush1.msra.mxu0 0.0
    %1886 = vmatprep.subr.mxu0 0.0
    %1887 = vmatpush1.msra.mxu0 0.0
    %1888 = vmatprep.subr.mxu0 0.0
    %1889 = vmatpush1.msra.mxu0 0.0
    %1890 = vmatprep.subr.mxu0 0.0
    %1891 = vmatpush1.msra.mxu0 0.0
    %1892 = vmatprep.subr.mxu0 0.0
    %1893 = vmatpush1.msra.mxu0 0.0
    %1894 = vmatprep.subr.mxu0 0.0
    %1895 = vmatpush1.msra.mxu0 %v1861
    %1896 = vmatprep.subr.mxu0 0.0
    %1897 = vmatpush1.msra.mxu0 %v1859
    %1898 = vmatprep.subr.mxu0 0.0
    %1899 = vmatpush1.msra.mxu0 %v1857
    %1900 = vmatprep.subr.mxu0 0.0
    %1901 = vmatpush2.msra.mxu0 0.0
    %1902 = vmatprep.subr.mxu0 0.0
    %1903 = vmatpush2.msra.mxu0 0.0
    %1904 = vmatprep.subr.mxu0 0.0
    %1905 = vmatpush2.msra.mxu0 0.0
    %1906 = vmatprep.subr.mxu0 0.0
    %1907 = vmatpush2.msra.mxu0 0.0
    %1908 = vmatprep.subr.mxu0 0.0
    %1909 = vmatpush2.msra.mxu0 0.0
    %1910 = vmatprep.subr.mxu0 0.0
    %1911 = vmatpush2.msra.mxu0 0.0
    %1912 = vmatprep.subr.mxu0 0.0
    %1913 = vmatpush2.msra.mxu0 0.0
    %1914 = vmatprep.subr.mxu0 0.0
    %1915 = vmatpush2.msra.mxu0 0.0
    %1916 = vmatprep.subr.mxu0 0.0
    %1917 = vmatpush2.msra.mxu0 0.0
    %1918 = vmatprep.subr.mxu0 0.0
    %1919 = vmatpush2.msra.mxu0 0.0
    %1920 = vmatprep.subr.mxu0 0.0
    %1921 = vmatpush2.msra.mxu0 0.0
    %1922 = vmatprep.subr.mxu0 0.0
    %1923 = vmatpush2.msra.mxu0 0.0
    %1924 = vmatprep.subr.mxu0 0.0
    %1925 = vmatpush2.msra.mxu0 0.0
    %1926 = vmatprep.subr.mxu0 0.0
    %1927 = vmatpush2.msra.mxu0 0.0
    %1928 = vmatprep.subr.mxu0 0.0
    %1929 = vmatpush2.msra.mxu0 0.0
    %1930 = vmatprep.subr.mxu0 0.0
    %1931 = vmatpush2.msra.mxu0 0.0
    %1932 = vmatprep.mubr.f32.mxu0 0.0
    %1933 = vmatmul.mubr.f32.gmra.mxu0 %v1866
    %v1934 = vpop.f32.mrf.mxu0
    %v1935 = vadd.f32 0.0, %v1934
    %v1936 = vpop.f32.mrf.mxu0
    %1937 = vdwg.mxu0
    %1938 = vrot.lane.b32.xlu0 %v581, 96
    %v1939 = vpop.permute.xlu0 %1938
    %1940 = vrot.lane.b32.xlu0 %v586, 96
    %v1941 = vpop.permute.xlu0 %1940
    %1942 = vrot.lane.b32.xlu0 %v591, 96
    %v1943 = vpop.permute.xlu0 %1942
    %v1948 = vsel %vm1536, %v1522, 0
    %1950 = vmatprep.subr.mxu0 0.0
    %1951 = vmatpush1.msra.mxu0 0.0
    %1952 = vmatprep.subr.mxu0 0.0
    %1953 = vmatpush1.msra.mxu0 0.0
    %1954 = vmatprep.subr.mxu0 0.0
    %1955 = vmatpush1.msra.mxu0 0.0
    %1956 = vmatprep.subr.mxu0 0.0
    %1957 = vmatpush1.msra.mxu0 0.0
    %1958 = vmatprep.subr.mxu0 0.0
    %1959 = vmatpush1.msra.mxu0 0.0
    %1960 = vmatprep.subr.mxu0 0.0
    %1961 = vmatpush1.msra.mxu0 0.0
    %1962 = vmatprep.subr.mxu0 0.0
    %1963 = vmatpush1.msra.mxu0 0.0
    %1964 = vmatprep.subr.mxu0 0.0
    %1965 = vmatpush1.msra.mxu0 0.0
    %1966 = vmatprep.subr.mxu0 0.0
    %1967 = vmatpush1.msra.mxu0 0.0
    %1968 = vmatprep.subr.mxu0 0.0
    %1969 = vmatpush1.msra.mxu0 0.0
    %1970 = vmatprep.subr.mxu0 0.0
    %1971 = vmatpush1.msra.mxu0 0.0
    %1972 = vmatprep.subr.mxu0 0.0
    %1973 = vmatpush1.msra.mxu0 0.0
    %1974 = vmatprep.subr.mxu0 0.0
    %1975 = vmatpush1.msra.mxu0 0.0
    %1976 = vmatprep.subr.mxu0 0.0
    %1977 = vmatpush1.msra.mxu0 %v1943
    %1978 = vmatprep.subr.mxu0 0.0
    %1979 = vmatpush1.msra.mxu0 %v1941
    %1980 = vmatprep.subr.mxu0 0.0
    %1981 = vmatpush1.msra.mxu0 %v1939
    %1982 = vmatprep.subr.mxu0 0.0
    %1983 = vmatpush2.msra.mxu0 0.0
    %1984 = vmatprep.subr.mxu0 0.0
    %1985 = vmatpush2.msra.mxu0 0.0
    %1986 = vmatprep.subr.mxu0 0.0
    %1987 = vmatpush2.msra.mxu0 0.0
    %1988 = vmatprep.subr.mxu0 0.0
    %1989 = vmatpush2.msra.mxu0 0.0
    %1990 = vmatprep.subr.mxu0 0.0
    %1991 = vmatpush2.msra.mxu0 0.0
    %1992 = vmatprep.subr.mxu0 0.0
    %1993 = vmatpush2.msra.mxu0 0.0
    %1994 = vmatprep.subr.mxu0 0.0
    %1995 = vmatpush2.msra.mxu0 0.0
    %1996 = vmatprep.subr.mxu0 0.0
    %1997 = vmatpush2.msra.mxu0 0.0
    %1998 = vmatprep.subr.mxu0 0.0
    %1999 = vmatpush2.msra.mxu0 0.0
    %2000 = vmatprep.subr.mxu0 0.0
    %2001 = vmatpush2.msra.mxu0 0.0
    %2002 = vmatprep.subr.mxu0 0.0
    %2003 = vmatpush2.msra.mxu0 0.0
    %2004 = vmatprep.subr.mxu0 0.0
    %2005 = vmatpush2.msra.mxu0 0.0
    %2006 = vmatprep.subr.mxu0 0.0
    %2007 = vmatpush2.msra.mxu0 0.0
    %2008 = vmatprep.subr.mxu0 0.0
    %2009 = vmatpush2.msra.mxu0 0.0
    %2010 = vmatprep.subr.mxu0 0.0
    %2011 = vmatpush2.msra.mxu0 0.0
    %2012 = vmatprep.subr.mxu0 0.0
    %2013 = vmatpush2.msra.mxu0 0.0
    %2014 = vmatprep.mubr.f32.mxu0 0.0
    %2015 = vmatmul.mubr.f32.gmra.mxu0 %v1948
    %v2016 = vpop.f32.mrf.mxu0
    %v2017 = vadd.f32 0.0, %v2016
    %v2018 = vpop.f32.mrf.mxu0
    %2019 = vdwg.mxu0
    %2020 = vrot.lane.b32.xlu0 %v596, 96
    %v2021 = vpop.permute.xlu0 %2020
    %2022 = vrot.lane.b32.xlu0 %v601, 96
    %v2023 = vpop.permute.xlu0 %2022
    %2024 = vrot.lane.b32.xlu0 %v606, 96
    %v2025 = vpop.permute.xlu0 %2024
    %v2030 = vsel %vm1536, %v1524, 0
    %2032 = vmatprep.subr.mxu0 0.0
    %2033 = vmatpush1.msra.mxu0 0.0
    %2034 = vmatprep.subr.mxu0 0.0
    %2035 = vmatpush1.msra.mxu0 0.0
    %2036 = vmatprep.subr.mxu0 0.0
    %2037 = vmatpush1.msra.mxu0 0.0
    %2038 = vmatprep.subr.mxu0 0.0
    %2039 = vmatpush1.msra.mxu0 0.0
    %2040 = vmatprep.subr.mxu0 0.0
    %2041 = vmatpush1.msra.mxu0 0.0
    %2042 = vmatprep.subr.mxu0 0.0
    %2043 = vmatpush1.msra.mxu0 0.0
    %2044 = vmatprep.subr.mxu0 0.0
    %2045 = vmatpush1.msra.mxu0 0.0
    %2046 = vmatprep.subr.mxu0 0.0
    %2047 = vmatpush1.msra.mxu0 0.0
    %2048 = vmatprep.subr.mxu0 0.0
    %2049 = vmatpush1.msra.mxu0 0.0
    %2050 = vmatprep.subr.mxu0 0.0
    %2051 = vmatpush1.msra.mxu0 0.0
    %2052 = vmatprep.subr.mxu0 0.0
    %2053 = vmatpush1.msra.mxu0 0.0
    %2054 = vmatprep.subr.mxu0 0.0
    %2055 = vmatpush1.msra.mxu0 0.0
    %2056 = vmatprep.subr.mxu0 0.0
    %2057 = vmatpush1.msra.mxu0 0.0
    %2058 = vmatprep.subr.mxu0 0.0
    %2059 = vmatpush1.msra.mxu0 %v2025
    %2060 = vmatprep.subr.mxu0 0.0
    %2061 = vmatpush1.msra.mxu0 %v2023
    %2062 = vmatprep.subr.mxu0 0.0
    %2063 = vmatpush1.msra.mxu0 %v2021
    %2064 = vmatprep.subr.mxu0 0.0
    %2065 = vmatpush2.msra.mxu0 0.0
    %2066 = vmatprep.subr.mxu0 0.0
    %2067 = vmatpush2.msra.mxu0 0.0
    %2068 = vmatprep.subr.mxu0 0.0
    %2069 = vmatpush2.msra.mxu0 0.0
    %2070 = vmatprep.subr.mxu0 0.0
    %2071 = vmatpush2.msra.mxu0 0.0
    %2072 = vmatprep.subr.mxu0 0.0
    %2073 = vmatpush2.msra.mxu0 0.0
    %2074 = vmatprep.subr.mxu0 0.0
    %2075 = vmatpush2.msra.mxu0 0.0
    %2076 = vmatprep.subr.mxu0 0.0
    %2077 = vmatpush2.msra.mxu0 0.0
    %2078 = vmatprep.subr.mxu0 0.0
    %2079 = vmatpush2.msra.mxu0 0.0
    %2080 = vmatprep.subr.mxu0 0.0
    %2081 = vmatpush2.msra.mxu0 0.0
    %2082 = vmatprep.subr.mxu0 0.0
    %2083 = vmatpush2.msra.mxu0 0.0
    %2084 = vmatprep.subr.mxu0 0.0
    %2085 = vmatpush2.msra.mxu0 0.0
    %2086 = vmatprep.subr.mxu0 0.0
    %2087 = vmatpush2.msra.mxu0 0.0
    %2088 = vmatprep.subr.mxu0 0.0
    %2089 = vmatpush2.msra.mxu0 0.0
    %2090 = vmatprep.subr.mxu0 0.0
    %2091 = vmatpush2.msra.mxu0 0.0
    %2092 = vmatprep.subr.mxu0 0.0
    %2093 = vmatpush2.msra.mxu0 0.0
    %2094 = vmatprep.subr.mxu0 0.0
    %2095 = vmatpush2.msra.mxu0 0.0
    %2096 = vmatprep.mubr.f32.mxu0 0.0
    %2097 = vmatmul.mubr.f32.gmra.mxu0 %v2030
    %v2098 = vpop.f32.mrf.mxu0
    %v2099 = vadd.f32 0.0, %v2098
    %v2100 = vpop.f32.mrf.mxu0
    %2101 = vdwg.mxu0
    %2102 = vrot.lane.b32.xlu0 %v611, 96
    %v2103 = vpop.permute.xlu0 %2102
    %2104 = vrot.lane.b32.xlu0 %v616, 96
    %v2105 = vpop.permute.xlu0 %2104
    %2106 = vrot.lane.b32.xlu0 %v621, 96
    %v2107 = vpop.permute.xlu0 %2106
    %v2112 = vsel %vm1536, %v1526, 0
    %2114 = vmatprep.subr.mxu0 0.0
    %2115 = vmatpush1.msra.mxu0 0.0
    %2116 = vmatprep.subr.mxu0 0.0
    %2117 = vmatpush1.msra.mxu0 0.0
    %2118 = vmatprep.subr.mxu0 0.0
    %2119 = vmatpush1.msra.mxu0 0.0
    %2120 = vmatprep.subr.mxu0 0.0
    %2121 = vmatpush1.msra.mxu0 0.0
    %2122 = vmatprep.subr.mxu0 0.0
    %2123 = vmatpush1.msra.mxu0 0.0
    %2124 = vmatprep.subr.mxu0 0.0
    %2125 = vmatpush1.msra.mxu0 0.0
    %2126 = vmatprep.subr.mxu0 0.0
    %2127 = vmatpush1.msra.mxu0 0.0
    %2128 = vmatprep.subr.mxu0 0.0
    %2129 = vmatpush1.msra.mxu0 0.0
    %2130 = vmatprep.subr.mxu0 0.0
    %2131 = vmatpush1.msra.mxu0 0.0
    %2132 = vmatprep.subr.mxu0 0.0
    %2133 = vmatpush1.msra.mxu0 0.0
    %2134 = vmatprep.subr.mxu0 0.0
    %2135 = vmatpush1.msra.mxu0 0.0
    %2136 = vmatprep.subr.mxu0 0.0
    %2137 = vmatpush1.msra.mxu0 0.0
    %2138 = vmatprep.subr.mxu0 0.0
    %2139 = vmatpush1.msra.mxu0 0.0
    %2140 = vmatprep.subr.mxu0 0.0
    %2141 = vmatpush1.msra.mxu0 %v2107
    %2142 = vmatprep.subr.mxu0 0.0
    %2143 = vmatpush1.msra.mxu0 %v2105
    %2144 = vmatprep.subr.mxu0 0.0
    %2145 = vmatpush1.msra.mxu0 %v2103
    %2146 = vmatprep.subr.mxu0 0.0
    %2147 = vmatpush2.msra.mxu0 0.0
    %2148 = vmatprep.subr.mxu0 0.0
    %2149 = vmatpush2.msra.mxu0 0.0
    %2150 = vmatprep.subr.mxu0 0.0
    %2151 = vmatpush2.msra.mxu0 0.0
    %2152 = vmatprep.subr.mxu0 0.0
    %2153 = vmatpush2.msra.mxu0 0.0
    %2154 = vmatprep.subr.mxu0 0.0
    %2155 = vmatpush2.msra.mxu0 0.0
    %2156 = vmatprep.subr.mxu0 0.0
    %2157 = vmatpush2.msra.mxu0 0.0
    %2158 = vmatprep.subr.mxu0 0.0
    %2159 = vmatpush2.msra.mxu0 0.0
    %2160 = vmatprep.subr.mxu0 0.0
    %2161 = vmatpush2.msra.mxu0 0.0
    %2162 = vmatprep.subr.mxu0 0.0
    %2163 = vmatpush2.msra.mxu0 0.0
    %2164 = vmatprep.subr.mxu0 0.0
    %2165 = vmatpush2.msra.mxu0 0.0
    %2166 = vmatprep.subr.mxu0 0.0
    %2167 = vmatpush2.msra.mxu0 0.0
    %2168 = vmatprep.subr.mxu0 0.0
    %2169 = vmatpush2.msra.mxu0 0.0
    %2170 = vmatprep.subr.mxu0 0.0
    %2171 = vmatpush2.msra.mxu0 0.0
    %2172 = vmatprep.subr.mxu0 0.0
    %2173 = vmatpush2.msra.mxu0 0.0
    %2174 = vmatprep.subr.mxu0 0.0
    %2175 = vmatpush2.msra.mxu0 0.0
    %2176 = vmatprep.subr.mxu0 0.0
    %2177 = vmatpush2.msra.mxu0 0.0
    %2178 = vmatprep.mubr.f32.mxu0 0.0
    %2179 = vmatmul.mubr.f32.gmra.mxu0 %v2112
    %v2180 = vpop.f32.mrf.mxu0
    %v2181 = vadd.f32 0.0, %v2180
    %v2182 = vpop.f32.mrf.mxu0
    %2183 = vdwg.mxu0
    %v2184 = vmax.f32 %v1607, 0.0
    %v2185 = vmax.f32 %v1689, 0.0
    %v2186 = vmax.f32 %v1771, 0.0
    %v2187 = vmax.f32 %v1853, 0.0
    %v2188 = vmax.f32 %v1935, 0.0
    %v2189 = vmax.f32 %v2017, 0.0
    %v2190 = vmax.f32 %v2099, 0.0
    %v2191 = vmax.f32 %v2181, 0.0
    %v2192 = vld [vmem:[%s6] sm:$0xff]
    %v2193 = vld [vmem:[%s6 + $0x8] sm:$0xff]
    %v2194 = vld [vmem:[%s6 + $0x10] sm:$0xff]
    %v2195 = vld [vmem:[%s6 + $0x18] sm:$0xff]
    %v2196 = vld [vmem:[%s7] sm:$0x1]
    %v2198 = vlaneseq
    %v2199 = vshrl.u32 %v2198, 7
    %v2200 = vsub.s32 0, %v2199
    %v2201 = vrot.slane %v2196, %v2200
    %v2211 = vrot.slane %v2185, 7
    %v2212 = vsel %vm629, %v2211, %v2184
    %v2213 = vrot.slane %v2186, 6
    %v2214 = vsel %vm632, %v2213, %v2212
    %v2215 = vrot.slane %v2187, 5
    %v2216 = vsel %vm635, %v2215, %v2214
    %v2217 = vrot.slane %v2188, 4
    %v2218 = vsel %vm638, %v2217, %v2216
    %v2219 = vrot.slane %v2189, 3
    %v2220 = vsel %vm641, %v2219, %v2218
    %v2221 = vrot.slane %v2190, 2
    %v2222 = vsel %vm644, %v2221, %v2220
    %v2223 = vrot.slane %v2191, 1
    %v2224 = vsel %vm647, %v2223, %v2222
    %v2225 = vsel %vm366, %v2224, 0
    %2227 = vmatprep.subr.mxu0 0.0
    %2228 = vmatpush1.msra.mxu0 0.0
    %2229 = vmatprep.subr.mxu0 0.0
    %2230 = vmatpush1.msra.mxu0 0.0
    %2231 = vmatprep.subr.mxu0 0.0
    %2232 = vmatpush1.msra.mxu0 0.0
    %2233 = vmatprep.subr.mxu0 0.0
    %2234 = vmatpush1.msra.mxu0 0.0
    %2235 = vmatprep.subr.mxu0 0.0
    %2236 = vmatpush1.msra.mxu0 0.0
    %2237 = vmatprep.subr.mxu0 0.0
    %2238 = vmatpush1.msra.mxu0 0.0
    %2239 = vmatprep.subr.mxu0 0.0
    %2240 = vmatpush1.msra.mxu0 0.0
    %2241 = vmatprep.subr.mxu0 0.0
    %2242 = vmatpush1.msra.mxu0 0.0
    %2243 = vmatprep.subr.mxu0 0.0
    %2244 = vmatpush1.msra.mxu0 0.0
    %2245 = vmatprep.subr.mxu0 0.0
    %2246 = vmatpush1.msra.mxu0 0.0
    %2247 = vmatprep.subr.mxu0 0.0
    %2248 = vmatpush1.msra.mxu0 0.0
    %2249 = vmatprep.subr.mxu0 0.0
    %2250 = vmatpush1.msra.mxu0 0.0
    %2251 = vmatprep.subr.mxu0 0.0
    %2252 = vmatpush1.msra.mxu0 %v2195
    %2253 = vmatprep.subr.mxu0 0.0
    %2254 = vmatpush1.msra.mxu0 %v2194
    %2255 = vmatprep.subr.mxu0 0.0
    %2256 = vmatpush1.msra.mxu0 %v2193
    %2257 = vmatprep.subr.mxu0 0.0
    %2258 = vmatpush1.msra.mxu0 %v2192
    %2259 = vmatprep.subr.mxu0 0.0
    %2260 = vmatpush2.msra.mxu0 0.0
    %2261 = vmatprep.subr.mxu0 0.0
    %2262 = vmatpush2.msra.mxu0 0.0
    %2263 = vmatprep.subr.mxu0 0.0
    %2264 = vmatpush2.msra.mxu0 0.0
    %2265 = vmatprep.subr.mxu0 0.0
    %2266 = vmatpush2.msra.mxu0 0.0
    %2267 = vmatprep.subr.mxu0 0.0
    %2268 = vmatpush2.msra.mxu0 0.0
    %2269 = vmatprep.subr.mxu0 0.0
    %2270 = vmatpush2.msra.mxu0 0.0
    %2271 = vmatprep.subr.mxu0 0.0
    %2272 = vmatpush2.msra.mxu0 0.0
    %2273 = vmatprep.subr.mxu0 0.0
    %2274 = vmatpush2.msra.mxu0 0.0
    %2275 = vmatprep.subr.mxu0 0.0
    %2276 = vmatpush2.msra.mxu0 0.0
    %2277 = vmatprep.subr.mxu0 0.0
    %2278 = vmatpush2.msra.mxu0 0.0
    %2279 = vmatprep.subr.mxu0 0.0
    %2280 = vmatpush2.msra.mxu0 0.0
    %2281 = vmatprep.subr.mxu0 0.0
    %2282 = vmatpush2.msra.mxu0 0.0
    %2283 = vmatprep.subr.mxu0 0.0
    %2284 = vmatpush2.msra.mxu0 0.0
    %2285 = vmatprep.subr.mxu0 0.0
    %2286 = vmatpush2.msra.mxu0 0.0
    %2287 = vmatprep.subr.mxu0 0.0
    %2288 = vmatpush2.msra.mxu0 0.0
    %2289 = vmatprep.subr.mxu0 0.0
    %2290 = vmatpush2.msra.mxu0 0.0
    %2291 = vmatprep.mubr.f32.mxu0 0.0
    %2292 = vmatmul.mubr.f32.gmra.mxu0 %v2225
    %v2293 = vpop.f32.mrf.mxu0
    %v2294 = vadd.f32 %v2201, %v2293
    %v2295 = vpop.f32.mrf.mxu0
    %2296 = vdwg.mxu0
    %v2297 = vld [vmem:[%s1] sm:$0xff]
    %v2298 = vld [vmem:[%s8] sm:$0xff]
    %v2299 = vld [vmem:[%s9] sm:$0x1]
    %v2301 = vlaneseq
    %v2302 = vshrl.u32 %v2301, 7
    %v2303 = vsub.s32 0, %v2302
    %v2304 = vrot.slane %v2299, %v2303
    %vm2306 = vcmask 64512
    %v2308 = vsel %vm2306, %v2297, 0
    %2310 = vmatprep.subr.mxu0 0.0
    %2311 = vmatpush1.msra.mxu0 0.0
    %2312 = vmatprep.subr.mxu0 0.0
    %2313 = vmatpush1.msra.mxu0 0.0
    %2314 = vmatprep.subr.mxu0 0.0
    %2315 = vmatpush1.msra.mxu0 0.0
    %2316 = vmatprep.subr.mxu0 0.0
    %2317 = vmatpush1.msra.mxu0 0.0
    %2318 = vmatprep.subr.mxu0 0.0
    %2319 = vmatpush1.msra.mxu0 0.0
    %2320 = vmatprep.subr.mxu0 0.0
    %2321 = vmatpush1.msra.mxu0 0.0
    %2322 = vmatprep.subr.mxu0 0.0
    %2323 = vmatpush1.msra.mxu0 0.0
    %2324 = vmatprep.subr.mxu0 0.0
    %2325 = vmatpush1.msra.mxu0 0.0
    %2326 = vmatprep.subr.mxu0 0.0
    %2327 = vmatpush1.msra.mxu0 0.0
    %2328 = vmatprep.subr.mxu0 0.0
    %2329 = vmatpush1.msra.mxu0 0.0
    %2330 = vmatprep.subr.mxu0 0.0
    %2331 = vmatpush1.msra.mxu0 0.0
    %2332 = vmatprep.subr.mxu0 0.0
    %2333 = vmatpush1.msra.mxu0 0.0
    %2334 = vmatprep.subr.mxu0 0.0
    %2335 = vmatpush1.msra.mxu0 0.0
    %2336 = vmatprep.subr.mxu0 0.0
    %2337 = vmatpush1.msra.mxu0 0.0
    %2338 = vmatprep.subr.mxu0 0.0
    %2339 = vmatpush1.msra.mxu0 0.0
    %2340 = vmatprep.subr.mxu0 0.0
    %2341 = vmatpush1.msra.mxu0 %v2298
    %2342 = vmatprep.subr.mxu0 0.0
    %2343 = vmatpush2.msra.mxu0 0.0
    %2344 = vmatprep.subr.mxu0 0.0
    %2345 = vmatpush2.msra.mxu0 0.0
    %2346 = vmatprep.subr.mxu0 0.0
    %2347 = vmatpush2.msra.mxu0 0.0
    %2348 = vmatprep.subr.mxu0 0.0
    %2349 = vmatpush2.msra.mxu0 0.0
    %2350 = vmatprep.subr.mxu0 0.0
    %2351 = vmatpush2.msra.mxu0 0.0
    %2352 = vmatprep.subr.mxu0 0.0
    %2353 = vmatpush2.msra.mxu0 0.0
    %2354 = vmatprep.subr.mxu0 0.0
    %2355 = vmatpush2.msra.mxu0 0.0
    %2356 = vmatprep.subr.mxu0 0.0
    %2357 = vmatpush2.msra.mxu0 0.0
    %2358 = vmatprep.subr.mxu0 0.0
    %2359 = vmatpush2.msra.mxu0 0.0
    %2360 = vmatprep.subr.mxu0 0.0
    %2361 = vmatpush2.msra.mxu0 0.0
    %2362 = vmatprep.subr.mxu0 0.0
    %2363 = vmatpush2.msra.mxu0 0.0
    %2364 = vmatprep.subr.mxu0 0.0
    %2365 = vmatpush2.msra.mxu0 0.0
    %2366 = vmatprep.subr.mxu0 0.0
    %2367 = vmatpush2.msra.mxu0 0.0
    %2368 = vmatprep.subr.mxu0 0.0
    %2369 = vmatpush2.msra.mxu0 0.0
    %2370 = vmatprep.subr.mxu0 0.0
    %2371 = vmatpush2.msra.mxu0 0.0
    %2372 = vmatprep.subr.mxu0 0.0
    %2373 = vmatpush2.msra.mxu0 0.0
    %2374 = vmatprep.mubr.f32.mxu0 0.0
    %2375 = vmatmul.mubr.f32.gmra.mxu0 %v2308
    %v2376 = vpop.f32.mrf.mxu0
    %v2377 = vadd.f32 %v2304, %v2376
    %v2378 = vpop.f32.mrf.mxu0
    %2379 = vdwg.mxu0
    %v2380 = vld [vmem:[%s10] sm:$0x1]
    %v2382 = vlaneseq
    %v2383 = vshrl.u32 %v2382, 7
    %v2384 = vsub.s32 0, %v2383
    %v2385 = vrot.slane %v2380, %v2384
    %v2387 = vmul.f32 %v2294, %v2385
    %v2388 = vld [vmem:[%s11] sm:$0x1]
    %v2390 = vlaneseq
    %v2391 = vshrl.u32 %v2390, 7
    %v2392 = vsub.s32 0, %v2391
    %v2393 = vrot.slane %v2388, %v2392
    %v2395 = vmul.f32 %v2377, %v2393
    %v2396 = vadd.f32 %v2387, %v2395
    %v2397 = vsel %vm366, %v2396, 0.0
    %2398 = vadd.xlane.f32.xlu0 %v2397
    %v2399 = vpop.xlane.xlu0 %2398
    %v2400 = vld [vmem:[#allocation2] sm:$0x1]
    %v2402 = vlaneseq
    %v2403 = vshrl.u32 %v2402, 7
    %v2404 = vsub.s32 0, %v2403
    %v2405 = vrot.slane %v2400, %v2404
    %v2407 = vadd.f32 %v2399, %v2405
    %2409 = vset.pattern.permute.xlu0 0
    %2410 = vperm.xlu0 %2409, %v2407
    %v2411 = vpop.permute.xlu0 %2410
    %v2412 = vlaneseq
    %v2413 = vshrl.u32 %v2412, 7
    %v2414 = vsub.s32 %v1428, %v2413
    %v2415 = vrot.slane %v2411, %v2414
    %vm2417 = vcmask 57344
    %2418 = vst.msk [vmem:[#allocation3] sm:$0x1] %vm2417, %v2415
    // Predicated region
    $region54: #{tpu_custom_call.1} parent=1 // pred_check
      _
    $region55: #{tpu_custom_call.1} parent=1 // pred_check_branch
      %2420 = sbr.rel (0) target = $region57
    $region56: #{tpu_custom_call.1} parent=1 // pred_region
      %s2422 = ssub.s32 16, 16
      %2423 = vsyncadd [#allocation4], %s2422
      %s2425 = sshll.u32 [#allocation3], 4
      %s2426 = int_to_ptr.vmem [resolvable:$true] %s2425
      %2428 = dma.vmem_to_hbm [thread:$0]  %s2426, 16, %s13, [#allocation4]
    $region57: #{tpu_custom_call.1} parent=1 // pred_fallthru
      _
    // Predicated region
    $region58: #{tpu_custom_call.1} parent=1 // pred_check
      _
    $region59: #{tpu_custom_call.1} parent=1 // pred_check_branch
      %2430 = sbr.rel (0) target = $region61
    $region60: #{tpu_custom_call.1} parent=1 // pred_region
      %2431 = dma.done [#allocation4], 16
    $region61: #{tpu_custom_call.1} parent=1 // pred_fallthru
      _
    %2432 = vsyncpa [#allocation4], 1

</llo_original>
